<compile_context>
chip_gen: v7x
topology: tpu7x:2x2x1
jax: 0.10.0
libtpu: 0.0.40
codegen_flags: <defaults>
</compile_context>

<pallas_src>
import jax
import jax.numpy as jnp
import numpy as np
from jax.experimental import pallas as pl
from jax.experimental.pallas import tpu as pltpu


N_FEATURES = 64               # `large=False` branch of the module
IN_DIM = N_FEATURES * 8 * 8   # 4096
HIDDEN = 100
HIDDEN_PAD = 128              # lane-aligned hidden width (do NOT pad to 256)
OUT_DIM = 1


def _round_up(x, m):
    return ((x + m - 1) // m) * m


def _mlp_kernel(x_ref, w1_ref, b1_ref, w2_ref, b2_ref, o_ref):
    # x_ref : (TB, IN_DIM)          f32   batch tile of flattened activations
    # w1_ref: (IN_DIM, HIDDEN_PAD)  bf16  resident across grid steps
    # b1_ref: (1, HIDDEN_PAD)       f32   zero-padded past HIDDEN
    # w2_ref: (1, HIDDEN_PAD)       f32   second-layer weight as a row, zero-padded
    # b2_ref: (1,)                  f32   scalar in SMEM
    # o_ref : (TB, OUT_DIM)         f32
    x_bf16 = x_ref[...].astype(jnp.bfloat16)   # in-kernel cast: hides under DMA
    h = jnp.dot(x_bf16, w1_ref[...], preferred_element_type=jnp.float32)
    h = jnp.maximum(h + b1_ref[...], 0.0)      # ReLU(inplace=True) semantics
    # (TB,128) x (128,1): VPU multiply + cross-lane reduce instead of an N=1
    # MXU matmul (1/256 MXU utilization + result-FIFO drain for trivial work).
    out = jnp.sum(h * w2_ref[...], axis=-1, keepdims=True)
    o_ref[...] = out + b2_ref[0]


def prepare_params(w1, b1, w2, b2):
    """One-time padding / casting of the PyTorch-equivalent parameters.

    w1: (IN_DIM, HIDDEN), b1: (HIDDEN,), w2: (HIDDEN, OUT_DIM), b2: (OUT_DIM,)
    Returns kernel-ready (w1p bf16, b1p f32, w2p f32, b2p f32).
    Padded entries are zero (required for correctness).
    """
    pad_h = HIDDEN_PAD - HIDDEN
    w1p = jnp.pad(w1.astype(jnp.float32), ((0, 0), (0, pad_h))).astype(jnp.bfloat16)
    b1p = jnp.pad(b1.astype(jnp.float32), (0, pad_h)).reshape(1, HIDDEN_PAD)
    # w2 (HIDDEN, 1) -> row (1, HIDDEN_PAD); zero-padded entries contribute nothing.
    w2p = jnp.pad(w2.astype(jnp.float32).reshape(1, HIDDEN), ((0, 0), (0, pad_h)))
    b2p = b2.astype(jnp.float32).reshape(OUT_DIM)   # (1,) scalar for SMEM
    return w1p, b1p, w2p, b2p


def _tile_and_vmem_limit(batch):
    """Generation-aware batch tile / scoped-VMEM choice (v7x has 64 MiB VMEM)."""
    try:
        info = pltpu.get_tpu_info()
        vmem_cap = getattr(info, "vmem_capacity_bytes", 64 * 1024 * 1024)
    except Exception:
        vmem_cap = 64 * 1024 * 1024                    # assume smallest if unknown
    if vmem_cap >= 96 * 1024 * 1024:                   # v5e / v6e (128 MiB VMEM)
        max_tb, vmem_limit = 1024, 64 * 1024 * 1024
    else:                                              # v7x (64 MiB VMEM) / unknown
        max_tb, vmem_limit = 512, 40 * 1024 * 1024
    # >= 2 grid steps when the batch allows it (pipelining + 2 TCs on v7x);
    # multiple of 16 so bf16 packs full (16,128) sublane tiles.
    tb = max(16, min(max_tb, _round_up(pl.cdiv(batch, 2), 16)))
    return tb, vmem_limit


def discriminator_forward(x, w1p, b1p, w2p, b2p):
    """x: (B, C, H, W) NCHW with C*H*W == 4096. Returns (B, 1) float32."""
    B = x.shape[0]
    x_flat = x.reshape(B, -1).astype(jnp.float32)   # same as torch .view(B, -1)
    assert x_flat.shape[1] == IN_DIM, f"expected flattened dim {IN_DIM}"

    tb, vmem_limit = _tile_and_vmem_limit(B)
    nb = pl.cdiv(B, tb)

    flops = 2 * B * IN_DIM * HIDDEN_PAD + 3 * B * HIDDEN_PAD
    bytes_accessed = (B * IN_DIM * 4             # x (f32, single read)
                      + IN_DIM * HIDDEN_PAD * 2  # w1 (bf16, resident)
                      + 2 * HIDDEN_PAD * 4 + 4   # b1, w2 row, b2
                      + B * OUT_DIM * 4)         # output

    out = pl.pallas_call(
        _mlp_kernel,
        out_shape=jax.ShapeDtypeStruct((B, OUT_DIM), jnp.float32),
        grid=(nb,),
        in_specs=[
            pl.BlockSpec((tb, IN_DIM), lambda i: (i, 0)),          # x: batch-tiled
            pl.BlockSpec((IN_DIM, HIDDEN_PAD), lambda i: (0, 0)),  # w1: resident
            pl.BlockSpec((1, HIDDEN_PAD), lambda i: (0, 0)),       # b1: resident
            pl.BlockSpec((1, HIDDEN_PAD), lambda i: (0, 0)),       # w2 row: resident
            pl.BlockSpec(memory_space=pltpu.MemorySpace.SMEM),     # b2 scalar: SMEM
        ],
        out_specs=pl.BlockSpec((tb, OUT_DIM), lambda i: (i, 0)),
        compiler_params=pltpu.CompilerParams(
            dimension_semantics=("parallel",),   # v7x: shard batch over 2 TCs
            vmem_limit_bytes=vmem_limit,
        ),
        cost_estimate=pl.CostEstimate(
            flops=flops, transcendentals=0, bytes_accessed=bytes_accessed),
    )(x_flat, w1p, b1p, w2p, b2p)

    # PyTorch: .view(x.size(0), -1) on a (B, 1) tensor is still (B, 1)
    return out.reshape(B, -1)


def init_params(key):
    """Deterministic init mimicking nn.Linear default (uniform +/- 1/sqrt(fan_in))."""
    k1, k2, k3, k4 = jax.random.split(key, 4)
    bound1 = 1.0 / np.sqrt(IN_DIM)
    bound2 = 1.0 / np.sqrt(HIDDEN)
    # stored as (in, out) so the kernel does x @ W (transposed PyTorch layout)
    w1 = jax.random.uniform(k1, (IN_DIM, HIDDEN), jnp.float32, -bound1, bound1)
    b1 = jax.random.uniform(k2, (HIDDEN,), jnp.float32, -bound1, bound1)
    w2 = jax.random.uniform(k3, (HIDDEN, OUT_DIM), jnp.float32, -bound2, bound2)
    b2 = jax.random.uniform(k4, (OUT_DIM,), jnp.float32, -bound2, bound2)
    return w1, b1, w2, b2


if __name__ == "__main__":
    key = jax.random.PRNGKey(0)
    kx, kp = jax.random.split(key)

    # Input consistent with the module: (B, 64, 8, 8) flattens to 64*8*8 = 4096
    B = 2
    x = jax.random.normal(kx, (B, N_FEATURES, 8, 8), dtype=jnp.float32)

    w1, b1, w2, b2 = init_params(kp)
    w1p, b1p, w2p, b2p = prepare_params(w1, b1, w2, b2)  # pad/cast once

    out = discriminator_forward(x, w1p, b1p, w2p, b2p)
    out = jax.block_until_ready(out)

    # Host-side reference (float64) using the same bf16-rounded x / w1 the
    # kernel consumes internally, so the only difference is accumulation order.
    x_np = np.asarray(x.reshape(B, -1).astype(jnp.bfloat16).astype(jnp.float32),
                      dtype=np.float64)
    w1_np = np.asarray(w1p.astype(jnp.float32), dtype=np.float64)    # (4096, 128)
    b1_np = np.asarray(b1p, dtype=np.float64)                        # (1, 128)
    w2_np = np.asarray(w2p, dtype=np.float64)                        # (1, 128)
    b2_np = np.asarray(b2p, dtype=np.float64).reshape(1, 1)          # (1, 1)
    h_ref = np.maximum(x_np @ w1_np + b1_np, 0.0)
    ref = (h_ref * w2_np).sum(axis=-1, keepdims=True) + b2_np
    np.testing.assert_allclose(np.asarray(out, dtype=np.float64), ref,
                               rtol=1e-3, atol=1e-3)

    assert out.shape == (B, 1)
    print("KERNEL_OK")
</pallas_src>

<mosaic_0001>
module attributes {stable_mosaic.version = 11 : i64} {
  func.func @_mlp_kernel(%arg0: i32, %arg1: memref<16x4096xf32, #tpu.memory_space<vmem>>, %arg2: memref<4096x128xbf16, #tpu.memory_space<vmem>>, %arg3: memref<1x128xf32, #tpu.memory_space<vmem>>, %arg4: memref<1x128xf32, #tpu.memory_space<vmem>>, %arg5: memref<1xf32, #tpu.memory_space<smem>>, %arg6: memref<16x1xf32, #tpu.memory_space<vmem>>) attributes {dimension_semantics = [#tpu.dimension_semantics<parallel>], iteration_bounds = array<i64: 1>, scalar_prefetch = 0 : i64, scratch_operands = 0 : i64, tpu.core_type = #tpu.core_type<tc>, window_params = [{transform_indices = @transform_0, window_bounds = array<i64: 16, 4096>}, {pipeline_mode = #tpu.pipeline_mode<synchronous>, transform_indices = @transform_1, window_bounds = array<i64: 4096, 128>}, {pipeline_mode = #tpu.pipeline_mode<synchronous>, transform_indices = @transform_2, window_bounds = array<i64: 1, 128>}, {pipeline_mode = #tpu.pipeline_mode<synchronous>, transform_indices = @transform_3, window_bounds = array<i64: 1, 128>}, {transform_indices = @transform_4, window_bounds = array<i64: 1>}, {transform_indices = @transform_5, window_bounds = array<i64: 16, 1>}]} {
    %c0 = arith.constant 0 : index
    %c0_0 = arith.constant 0 : index
    %0 = vector.load %arg1[%c0, %c0_0] : memref<16x4096xf32, #tpu.memory_space<vmem>>, vector<16x4096xf32>
    %1 = arith.truncf %0 : vector<16x4096xf32> to vector<16x4096xbf16>
    %c0_1 = arith.constant 0 : index
    %c0_2 = arith.constant 0 : index
    %2 = vector.load %arg2[%c0_1, %c0_2] : memref<4096x128xbf16, #tpu.memory_space<vmem>>, vector<4096x128xbf16>
    %cst = arith.constant dense<0.000000e+00> : vector<16x128xf32>
    %3 = tpu.matmul %1, %2, %cst {dimension_numbers = #tpu.dot_dimension_numbers<[1], [0], [0], [1], [0, 0, 1, 1], [], []>} : vector<16x4096xbf16>, vector<4096x128xbf16>, vector<16x128xf32> -> vector<16x128xf32>
    %c0_3 = arith.constant 0 : index
    %c0_4 = arith.constant 0 : index
    %4 = vector.load %arg3[%c0_3, %c0_4] : memref<1x128xf32, #tpu.memory_space<vmem>>, vector<1x128xf32>
    %5 = vector.broadcast %4 : vector<1x128xf32> to vector<16x128xf32>
    %6 = arith.addf %3, %5 : vector<16x128xf32>
    %cst_5 = arith.constant 0.000000e+00 : f32
    %7 = vector.broadcast %cst_5 : f32 to vector<16x128xf32>
    %8 = arith.maximumf %6, %7 : vector<16x128xf32>
    %c0_6 = arith.constant 0 : index
    %c0_7 = arith.constant 0 : index
    %9 = vector.load %arg4[%c0_6, %c0_7] : memref<1x128xf32, #tpu.memory_space<vmem>>, vector<1x128xf32>
    %10 = vector.broadcast %9 : vector<1x128xf32> to vector<16x128xf32>
    %11 = arith.mulf %8, %10 : vector<16x128xf32>
    %cst_8 = arith.constant dense<0.000000e+00> : vector<16xf32>
    %12 = vector.multi_reduction <add>, %11, %cst_8 [1] : vector<16x128xf32> to vector<16xf32>
    %13 = vector.shape_cast %12 : vector<16xf32> to vector<16x1xf32>
    %c0_9 = arith.constant 0 : index
    %14 = memref.load %arg5[%c0_9] : memref<1xf32, #tpu.memory_space<smem>>
    %15 = vector.broadcast %14 : f32 to vector<16x1xf32>
    %16 = arith.addf %13, %15 : vector<16x1xf32>
    %c0_10 = arith.constant 0 : index
    %c0_11 = arith.constant 0 : index
    %17 = vector.load %arg6[%c0_10, %c0_11] : memref<16x1xf32, #tpu.memory_space<vmem>>, vector<16x1xf32>
    tpu.vector_store %arg6[%c0_10, %c0_11], %16 {strides = array<i32>} : memref<16x1xf32, #tpu.memory_space<vmem>>, vector<16x1xf32>,
    return
  }
  func.func @transform_0(%arg0: i32) -> (i32, i32) {
    %c0_i32 = arith.constant 0 : i32
    %c0_i32_0 = arith.constant 0 : i32
    return %arg0, %c0_i32 : i32, i32
  }
  func.func @transform_1(%arg0: i32) -> (i32, i32) {
    %c0_i32 = arith.constant 0 : i32
    %c0_i32_0 = arith.constant 0 : i32
    %c0_i32_1 = arith.constant 0 : i32
    return %c0_i32, %c0_i32_0 : i32, i32
  }
  func.func @transform_2(%arg0: i32) -> (i32, i32) {
    %c0_i32 = arith.constant 0 : i32
    %c0_i32_0 = arith.constant 0 : i32
    %c0_i32_1 = arith.constant 0 : i32
    return %c0_i32, %c0_i32_0 : i32, i32
  }
  func.func @transform_3(%arg0: i32) -> (i32, i32) {
    %c0_i32 = arith.constant 0 : i32
    %c0_i32_0 = arith.constant 0 : i32
    %c0_i32_1 = arith.constant 0 : i32
    return %c0_i32, %c0_i32_0 : i32, i32
  }
  func.func @transform_4(%arg0: i32) -> i32 {
    %c0_i32 = arith.constant 0 : i32
    %c0_i32_0 = arith.constant 0 : i32
    return %c0_i32 : i32
  }
  func.func @transform_5(%arg0: i32) -> (i32, i32) {
    %c0_i32 = arith.constant 0 : i32
    %c0_i32_0 = arith.constant 0 : i32
    return %arg0, %c0_i32 : i32, i32
  }
}

</mosaic_0001>

<llo_original>
// kernel: tpu_custom_call.1
$region0: #{tpu_custom_call.1}
  #allocation0 [shape = 'u32[]', space=smem, size = 0x4, offset = 0x4, fixed_abs, tag = 'smem constant byte address 0x4 - core index']
  #allocation1 [shape = 'u32[144,128]{1,0:T(1,128)}', space=vmem, size = 0x12000, scoped, tag = 'internal scratch']
  #allocation2 [shape = 'f32[1]{0:T(128)S(6)}', space=smem, size = 0x200, scoped, tag = 'scoped memory for tpu_custom_call.1']
  %s0 = inlined_call_operand.hbm [shape: f32[2,4096], index: 0, kind: input, shape index: {}]
  %s1 = inlined_call_operand.hbm [shape: bf16[4096,128], index: 1, kind: input, shape index: {}]
  %s2 = inlined_call_operand.vmem [shape: f32[1,128], index: 2, kind: input, shape index: {}]
  %s3 = inlined_call_operand.vmem [shape: f32[1,128], index: 3, kind: input, shape index: {}]
  %s4 = inlined_call_operand.<no memory space> [shape: f32[1], index: 4, kind: input, shape index: {}]
  %s5 = inlined_call_operand.vmem [shape: f32[2,1], index: 5, kind: output, shape index: {}]
  %s6 = sld [smem:[#allocation0]]
  $region68: #{tpu_custom_call.1} parent=0
    _
  %s8 = ssub.s32 1, %s6
  %s9 = scalar_select 0, %s8, %s6
  %10 = sst [smem:[#allocation2]] %s4
  $region1: #{tpu_custom_call.1} parent=0
    #allocation3 [shape = 'u8[262144]{0}', space=vmem, size = 0x40000, scoped, tag = 'input window, operand 0, single buffered']
    #allocation4 [shape = 's32[1]{0}', space=sflag, size = 0x4, scoped, tag = 'scoped memory for tpu_custom_call.1']
    #allocation5 [shape = 'u8[1048576]{0}', space=vmem, size = 0x100000, scoped, tag = 'input window, operand 1, single buffered']
    #allocation6 [shape = 's32[1]{0}', space=sflag, size = 0x4, scoped, tag = 'scoped memory for tpu_custom_call.1']
    #allocation7 [shape = 'u8[8192]{0}', space=vmem, size = 0x2000, scoped, tag = 'output window, operand 0, single buffered']
    %11 = vsyncpa [#allocation4], 0
    %12 = vsyncpa [#allocation6], 0
    // Predicated region
    $region2: #{tpu_custom_call.1} parent=1 // pred_check
      _
    $region3: #{tpu_custom_call.1} parent=1 // pred_check_branch
      %14 = sbr.rel (0) target = $region5
    $region4: #{tpu_custom_call.1} parent=1 // pred_region
      %s16 = ssub.s32 8192, 1024
      %17 = vsyncadd [#allocation4], %s16
      %s18 = sshll.u32 [#allocation3], 4
      %s19 = int_to_ptr.vmem [resolvable:$true] %s18
      %24 = dma.hbm_to_vmem [thread:$0]  %s0, 1024, %s19, [#allocation4], 1024, 1024, 64
    $region5: #{tpu_custom_call.1} parent=1 // pred_fallthru
      _
    // Predicated region
    $region6: #{tpu_custom_call.1} parent=1 // pred_check
      _
    $region7: #{tpu_custom_call.1} parent=1 // pred_check_branch
      %26 = sbr.rel (0) target = $region9
    $region8: #{tpu_custom_call.1} parent=1 // pred_region
      %s28 = ssub.s32 32768, 32768
      %29 = vsyncadd [#allocation6], %s28
      %s30 = sshll.u32 [#allocation5], 4
      %s31 = int_to_ptr.vmem [resolvable:$true] %s30
      %36 = dma.hbm_to_vmem [thread:$0]  %s1, 32768, %s31, [#allocation6], 64, 64, 4
    $region9: #{tpu_custom_call.1} parent=1 // pred_fallthru
      _
    // Predicated region
    $region10: #{tpu_custom_call.1} parent=1 // pred_check
      _
    $region11: #{tpu_custom_call.1} parent=1 // pred_check_branch
      %38 = sbr.rel (0) target = $region13
    $region12: #{tpu_custom_call.1} parent=1 // pred_region
      _
    $region13: #{tpu_custom_call.1} parent=1 // pred_fallthru
      _
    // Predicated region
    $region14: #{tpu_custom_call.1} parent=1 // pred_check
      _
    $region15: #{tpu_custom_call.1} parent=1 // pred_check_branch
      %40 = sbr.rel (0) target = $region17
    $region16: #{tpu_custom_call.1} parent=1 // pred_region
      _
    $region17: #{tpu_custom_call.1} parent=1 // pred_fallthru
      _
    // Predicated region
    $region18: #{tpu_custom_call.1} parent=1 // pred_check
      _
    $region19: #{tpu_custom_call.1} parent=1 // pred_check_branch
      %42 = sbr.rel (0) target = $region21
    $region20: #{tpu_custom_call.1} parent=1 // pred_region
      _
    $region21: #{tpu_custom_call.1} parent=1 // pred_fallthru
      _
    // Predicated region
    $region22: #{tpu_custom_call.1} parent=1 // pred_check
      _
    $region23: #{tpu_custom_call.1} parent=1 // pred_check_branch
      %44 = sbr.rel (0) target = $region25
    $region24: #{tpu_custom_call.1} parent=1 // pred_region
      %45 = dma.done [#allocation4], 8192
    $region25: #{tpu_custom_call.1} parent=1 // pred_fallthru
      _
    // Predicated region
    $region26: #{tpu_custom_call.1} parent=1 // pred_check
      _
    $region27: #{tpu_custom_call.1} parent=1 // pred_check_branch
      %47 = sbr.rel (0) target = $region29
    $region28: #{tpu_custom_call.1} parent=1 // pred_region
      %48 = dma.done [#allocation6], 32768
    $region29: #{tpu_custom_call.1} parent=1 // pred_fallthru
      _
    %v50 = vld [vmem:[#allocation3] sm:$0xff]
    %v51 = vld [vmem:[#allocation3 + $0x8] sm:$0xff]
    %v52 = vld [vmem:[#allocation3 + $0x10] sm:$0xff]
    %v53 = vld [vmem:[#allocation3 + $0x18] sm:$0xff]
    %v54 = vld [vmem:[#allocation3 + $0x20] sm:$0xff]
    %v55 = vld [vmem:[#allocation3 + $0x28] sm:$0xff]
    %v56 = vld [vmem:[#allocation3 + $0x30] sm:$0xff]
    %v57 = vld [vmem:[#allocation3 + $0x38] sm:$0xff]
    %v58 = vld [vmem:[#allocation3 + $0x40] sm:$0xff]
    %v59 = vld [vmem:[#allocation3 + $0x48] sm:$0xff]
    %v60 = vld [vmem:[#allocation3 + $0x50] sm:$0xff]
    %v61 = vld [vmem:[#allocation3 + $0x58] sm:$0xff]
    %v62 = vld [vmem:[#allocation3 + $0x60] sm:$0xff]
    %v63 = vld [vmem:[#allocation3 + $0x68] sm:$0xff]
    %v64 = vld [vmem:[#allocation3 + $0x70] sm:$0xff]
    %v65 = vld [vmem:[#allocation3 + $0x78] sm:$0xff]
    %v66 = vld [vmem:[#allocation3 + $0x80] sm:$0xff]
    %v67 = vld [vmem:[#allocation3 + $0x88] sm:$0xff]
    %v68 = vld [vmem:[#allocation3 + $0x90] sm:$0xff]
    %v69 = vld [vmem:[#allocation3 + $0x98] sm:$0xff]
    %v70 = vld [vmem:[#allocation3 + $0xa0] sm:$0xff]
    %v71 = vld [vmem:[#allocation3 + $0xa8] sm:$0xff]
    %v72 = vld [vmem:[#allocation3 + $0xb0] sm:$0xff]
    %v73 = vld [vmem:[#allocation3 + $0xb8] sm:$0xff]
    %v74 = vld [vmem:[#allocation3 + $0xc0] sm:$0xff]
    %v75 = vld [vmem:[#allocation3 + $0xc8] sm:$0xff]
    %v76 = vld [vmem:[#allocation3 + $0xd0] sm:$0xff]
    %v77 = vld [vmem:[#allocation3 + $0xd8] sm:$0xff]
    %v78 = vld [vmem:[#allocation3 + $0xe0] sm:$0xff]
    %v79 = vld [vmem:[#allocation3 + $0xe8] sm:$0xff]
    %v80 = vld [vmem:[#allocation3 + $0xf0] sm:$0xff]
    %v81 = vld [vmem:[#allocation3 + $0xf8] sm:$0xff]
    %v82 = vld [vmem:[#allocation3 + $0x100] sm:$0xff]
    %v83 = vld [vmem:[#allocation3 + $0x108] sm:$0xff]
    %v84 = vld [vmem:[#allocation3 + $0x110] sm:$0xff]
    %v85 = vld [vmem:[#allocation3 + $0x118] sm:$0xff]
    %v86 = vld [vmem:[#allocation3 + $0x120] sm:$0xff]
    %v87 = vld [vmem:[#allocation3 + $0x128] sm:$0xff]
    %v88 = vld [vmem:[#allocation3 + $0x130] sm:$0xff]
    %v89 = vld [vmem:[#allocation3 + $0x138] sm:$0xff]
    %v90 = vld [vmem:[#allocation3 + $0x140] sm:$0xff]
    %v91 = vld [vmem:[#allocation3 + $0x148] sm:$0xff]
    %v92 = vld [vmem:[#allocation3 + $0x150] sm:$0xff]
    %v93 = vld [vmem:[#allocation3 + $0x158] sm:$0xff]
    %v94 = vld [vmem:[#allocation3 + $0x160] sm:$0xff]
    %v95 = vld [vmem:[#allocation3 + $0x168] sm:$0xff]
    %v96 = vld [vmem:[#allocation3 + $0x170] sm:$0xff]
    %v97 = vld [vmem:[#allocation3 + $0x178] sm:$0xff]
    %v98 = vld [vmem:[#allocation3 + $0x180] sm:$0xff]
    %v99 = vld [vmem:[#allocation3 + $0x188] sm:$0xff]
    %v100 = vld [vmem:[#allocation3 + $0x190] sm:$0xff]
    %v101 = vld [vmem:[#allocation3 + $0x198] sm:$0xff]
    %v102 = vld [vmem:[#allocation3 + $0x1a0] sm:$0xff]
    %v103 = vld [vmem:[#allocation3 + $0x1a8] sm:$0xff]
    %v104 = vld [vmem:[#allocation3 + $0x1b0] sm:$0xff]
    %v105 = vld [vmem:[#allocation3 + $0x1b8] sm:$0xff]
    %v106 = vld [vmem:[#allocation3 + $0x1c0] sm:$0xff]
    %v107 = vld [vmem:[#allocation3 + $0x1c8] sm:$0xff]
    %v108 = vld [vmem:[#allocation3 + $0x1d0] sm:$0xff]
    %v109 = vld [vmem:[#allocation3 + $0x1d8] sm:$0xff]
    %v110 = vld [vmem:[#allocation3 + $0x1e0] sm:$0xff]
    %v111 = vld [vmem:[#allocation3 + $0x1e8] sm:$0xff]
    %v112 = vld [vmem:[#allocation3 + $0x1f0] sm:$0xff]
    %v113 = vld [vmem:[#allocation3 + $0x1f8] sm:$0xff]
    %v178 = vcombine.low %v50, %v58
    %v179 = vcombine.high %v50, %v58
    %v180 = vcombine.low %v66, %v74
    %v181 = vcombine.high %v66, %v74
    %v183 = vunpack.c.l.s4 1983009808
    %v184 = vunpack.c.0.s8 %v183
    %v185 = vlaneseq
    %v186 = vshrl.u32 %v185, 7
    %v187 = vsub.s32 %v184, %v186
    %v188 = vrot.slane %v178, %v187
    %v190 = vunpack.c.l.s4 1983009808
    %v191 = vunpack.c.0.s8 %v190
    %v192 = vlaneseq
    %v193 = vshrl.u32 %v192, 7
    %v194 = vsub.s32 %v191, %v193
    %v195 = vrot.slane %v179, %v194
    %v197 = vunpack.c.l.s4 1983009808
    %v198 = vunpack.c.0.s8 %v197
    %v199 = vlaneseq
    %v200 = vshrl.u32 %v199, 7
    %v201 = vsub.s32 %v198, %v200
    %v202 = vrot.slane %v180, %v201
    %v204 = vunpack.c.l.s4 1983009808
    %v205 = vunpack.c.0.s8 %v204
    %v206 = vlaneseq
    %v207 = vshrl.u32 %v206, 7
    %v208 = vsub.s32 %v205, %v207
    %v209 = vrot.slane %v181, %v208
    %v210 = vcombine.low %v188, %v202
    %v211 = vcombine.high %v188, %v202
    %v212 = vcombine.low %v195, %v209
    %v213 = vcombine.high %v195, %v209
    %v214 = vcombine.low %v51, %v59
    %v215 = vcombine.high %v51, %v59
    %v216 = vcombine.low %v67, %v75
    %v217 = vcombine.high %v67, %v75
    %v219 = vunpack.c.l.s4 1983009808
    %v220 = vunpack.c.0.s8 %v219
    %v221 = vlaneseq
    %v222 = vshrl.u32 %v221, 7
    %v223 = vsub.s32 %v220, %v222
    %v224 = vrot.slane %v214, %v223
    %v226 = vunpack.c.l.s4 1983009808
    %v227 = vunpack.c.0.s8 %v226
    %v228 = vlaneseq
    %v229 = vshrl.u32 %v228, 7
    %v230 = vsub.s32 %v227, %v229
    %v231 = vrot.slane %v215, %v230
    %v233 = vunpack.c.l.s4 1983009808
    %v234 = vunpack.c.0.s8 %v233
    %v235 = vlaneseq
    %v236 = vshrl.u32 %v235, 7
    %v237 = vsub.s32 %v234, %v236
    %v238 = vrot.slane %v216, %v237
    %v240 = vunpack.c.l.s4 1983009808
    %v241 = vunpack.c.0.s8 %v240
    %v242 = vlaneseq
    %v243 = vshrl.u32 %v242, 7
    %v244 = vsub.s32 %v241, %v243
    %v245 = vrot.slane %v217, %v244
    %v246 = vcombine.low %v224, %v238
    %v247 = vcombine.high %v224, %v238
    %v248 = vcombine.low %v231, %v245
    %v249 = vcombine.high %v231, %v245
    %v250 = vcombine.low %v52, %v60
    %v251 = vcombine.high %v52, %v60
    %v252 = vcombine.low %v68, %v76
    %v253 = vcombine.high %v68, %v76
    %v255 = vunpack.c.l.s4 1983009808
    %v256 = vunpack.c.0.s8 %v255
    %v257 = vlaneseq
    %v258 = vshrl.u32 %v257, 7
    %v259 = vsub.s32 %v256, %v258
    %v260 = vrot.slane %v250, %v259
    %v262 = vunpack.c.l.s4 1983009808
    %v263 = vunpack.c.0.s8 %v262
    %v264 = vlaneseq
    %v265 = vshrl.u32 %v264, 7
    %v266 = vsub.s32 %v263, %v265
    %v267 = vrot.slane %v251, %v266
    %v269 = vunpack.c.l.s4 1983009808
    %v270 = vunpack.c.0.s8 %v269
    %v271 = vlaneseq
    %v272 = vshrl.u32 %v271, 7
    %v273 = vsub.s32 %v270, %v272
    %v274 = vrot.slane %v252, %v273
    %v276 = vunpack.c.l.s4 1983009808
    %v277 = vunpack.c.0.s8 %v276
    %v278 = vlaneseq
    %v279 = vshrl.u32 %v278, 7
    %v280 = vsub.s32 %v277, %v279
    %v281 = vrot.slane %v253, %v280
    %v282 = vcombine.low %v260, %v274
    %v283 = vcombine.high %v260, %v274
    %v284 = vcombine.low %v267, %v281
    %v285 = vcombine.high %v267, %v281
    %v286 = vcombine.low %v53, %v61
    %v287 = vcombine.high %v53, %v61
    %v288 = vcombine.low %v69, %v77
    %v289 = vcombine.high %v69, %v77
    %v291 = vunpack.c.l.s4 1983009808
    %v292 = vunpack.c.0.s8 %v291
    %v293 = vlaneseq
    %v294 = vshrl.u32 %v293, 7
    %v295 = vsub.s32 %v292, %v294
    %v296 = vrot.slane %v286, %v295
    %v298 = vunpack.c.l.s4 1983009808
    %v299 = vunpack.c.0.s8 %v298
    %v300 = vlaneseq
    %v301 = vshrl.u32 %v300, 7
    %v302 = vsub.s32 %v299, %v301
    %v303 = vrot.slane %v287, %v302
    %v305 = vunpack.c.l.s4 1983009808
    %v306 = vunpack.c.0.s8 %v305
    %v307 = vlaneseq
    %v308 = vshrl.u32 %v307, 7
    %v309 = vsub.s32 %v306, %v308
    %v310 = vrot.slane %v288, %v309
    %v312 = vunpack.c.l.s4 1983009808
    %v313 = vunpack.c.0.s8 %v312
    %v314 = vlaneseq
    %v315 = vshrl.u32 %v314, 7
    %v316 = vsub.s32 %v313, %v315
    %v317 = vrot.slane %v289, %v316
    %v318 = vcombine.low %v296, %v310
    %v319 = vcombine.high %v296, %v310
    %v320 = vcombine.low %v303, %v317
    %v321 = vcombine.high %v303, %v317
    %v322 = vcombine.low %v54, %v62
    %v323 = vcombine.high %v54, %v62
    %v324 = vcombine.low %v70, %v78
    %v325 = vcombine.high %v70, %v78
    %v327 = vunpack.c.l.s4 1983009808
    %v328 = vunpack.c.0.s8 %v327
    %v329 = vlaneseq
    %v330 = vshrl.u32 %v329, 7
    %v331 = vsub.s32 %v328, %v330
    %v332 = vrot.slane %v322, %v331
    %v334 = vunpack.c.l.s4 1983009808
    %v335 = vunpack.c.0.s8 %v334
    %v336 = vlaneseq
    %v337 = vshrl.u32 %v336, 7
    %v338 = vsub.s32 %v335, %v337
    %v339 = vrot.slane %v323, %v338
    %v341 = vunpack.c.l.s4 1983009808
    %v342 = vunpack.c.0.s8 %v341
    %v343 = vlaneseq
    %v344 = vshrl.u32 %v343, 7
    %v345 = vsub.s32 %v342, %v344
    %v346 = vrot.slane %v324, %v345
    %v348 = vunpack.c.l.s4 1983009808
    %v349 = vunpack.c.0.s8 %v348
    %v350 = vlaneseq
    %v351 = vshrl.u32 %v350, 7
    %v352 = vsub.s32 %v349, %v351
    %v353 = vrot.slane %v325, %v352
    %v354 = vcombine.low %v332, %v346
    %v355 = vcombine.high %v332, %v346
    %v356 = vcombine.low %v339, %v353
    %v357 = vcombine.high %v339, %v353
    %v358 = vcombine.low %v55, %v63
    %v359 = vcombine.high %v55, %v63
    %v360 = vcombine.low %v71, %v79
    %v361 = vcombine.high %v71, %v79
    %v363 = vunpack.c.l.s4 1983009808
    %v364 = vunpack.c.0.s8 %v363
    %v365 = vlaneseq
    %v366 = vshrl.u32 %v365, 7
    %v367 = vsub.s32 %v364, %v366
    %v368 = vrot.slane %v358, %v367
    %v370 = vunpack.c.l.s4 1983009808
    %v371 = vunpack.c.0.s8 %v370
    %v372 = vlaneseq
    %v373 = vshrl.u32 %v372, 7
    %v374 = vsub.s32 %v371, %v373
    %v375 = vrot.slane %v359, %v374
    %v377 = vunpack.c.l.s4 1983009808
    %v378 = vunpack.c.0.s8 %v377
    %v379 = vlaneseq
    %v380 = vshrl.u32 %v379, 7
    %v381 = vsub.s32 %v378, %v380
    %v382 = vrot.slane %v360, %v381
    %v384 = vunpack.c.l.s4 1983009808
    %v385 = vunpack.c.0.s8 %v384
    %v386 = vlaneseq
    %v387 = vshrl.u32 %v386, 7
    %v388 = vsub.s32 %v385, %v387
    %v389 = vrot.slane %v361, %v388
    %v390 = vcombine.low %v368, %v382
    %v391 = vcombine.high %v368, %v382
    %v392 = vcombine.low %v375, %v389
    %v393 = vcombine.high %v375, %v389
    %v394 = vcombine.low %v56, %v64
    %v395 = vcombine.high %v56, %v64
    %v396 = vcombine.low %v72, %v80
    %v397 = vcombine.high %v72, %v80
    %v399 = vunpack.c.l.s4 1983009808
    %v400 = vunpack.c.0.s8 %v399
    %v401 = vlaneseq
    %v402 = vshrl.u32 %v401, 7
    %v403 = vsub.s32 %v400, %v402
    %v404 = vrot.slane %v394, %v403
    %v406 = vunpack.c.l.s4 1983009808
    %v407 = vunpack.c.0.s8 %v406
    %v408 = vlaneseq
    %v409 = vshrl.u32 %v408, 7
    %v410 = vsub.s32 %v407, %v409
    %v411 = vrot.slane %v395, %v410
    %v413 = vunpack.c.l.s4 1983009808
    %v414 = vunpack.c.0.s8 %v413
    %v415 = vlaneseq
    %v416 = vshrl.u32 %v415, 7
    %v417 = vsub.s32 %v414, %v416
    %v418 = vrot.slane %v396, %v417
    %v420 = vunpack.c.l.s4 1983009808
    %v421 = vunpack.c.0.s8 %v420
    %v422 = vlaneseq
    %v423 = vshrl.u32 %v422, 7
    %v424 = vsub.s32 %v421, %v423
    %v425 = vrot.slane %v397, %v424
    %v426 = vcombine.low %v404, %v418
    %v427 = vcombine.high %v404, %v418
    %v428 = vcombine.low %v411, %v425
    %v429 = vcombine.high %v411, %v425
    %v430 = vcombine.low %v57, %v65
    %v431 = vcombine.high %v57, %v65
    %v432 = vcombine.low %v73, %v81
    %v433 = vcombine.high %v73, %v81
    %v435 = vunpack.c.l.s4 1983009808
    %v436 = vunpack.c.0.s8 %v435
    %v437 = vlaneseq
    %v438 = vshrl.u32 %v437, 7
    %v439 = vsub.s32 %v436, %v438
    %v440 = vrot.slane %v430, %v439
    %v442 = vunpack.c.l.s4 1983009808
    %v443 = vunpack.c.0.s8 %v442
    %v444 = vlaneseq
    %v445 = vshrl.u32 %v444, 7
    %v446 = vsub.s32 %v443, %v445
    %v447 = vrot.slane %v431, %v446
    %v449 = vunpack.c.l.s4 1983009808
    %v450 = vunpack.c.0.s8 %v449
    %v451 = vlaneseq
    %v452 = vshrl.u32 %v451, 7
    %v453 = vsub.s32 %v450, %v452
    %v454 = vrot.slane %v432, %v453
    %v456 = vunpack.c.l.s4 1983009808
    %v457 = vunpack.c.0.s8 %v456
    %v458 = vlaneseq
    %v459 = vshrl.u32 %v458, 7
    %v460 = vsub.s32 %v457, %v459
    %v461 = vrot.slane %v433, %v460
    %v462 = vcombine.low %v440, %v454
    %v463 = vcombine.high %v440, %v454
    %v464 = vcombine.low %v447, %v461
    %v465 = vcombine.high %v447, %v461
    %v466 = vcombine.low %v82, %v90
    %v467 = vcombine.high %v82, %v90
    %v468 = vcombine.low %v98, %v106
    %v469 = vcombine.high %v98, %v106
    %v471 = vunpack.c.l.s4 1983009808
    %v472 = vunpack.c.0.s8 %v471
    %v473 = vlaneseq
    %v474 = vshrl.u32 %v473, 7
    %v475 = vsub.s32 %v472, %v474
    %v476 = vrot.slane %v466, %v475
    %v478 = vunpack.c.l.s4 1983009808
    %v479 = vunpack.c.0.s8 %v478
    %v480 = vlaneseq
    %v481 = vshrl.u32 %v480, 7
    %v482 = vsub.s32 %v479, %v481
    %v483 = vrot.slane %v467, %v482
    %v485 = vunpack.c.l.s4 1983009808
    %v486 = vunpack.c.0.s8 %v485
    %v487 = vlaneseq
    %v488 = vshrl.u32 %v487, 7
    %v489 = vsub.s32 %v486, %v488
    %v490 = vrot.slane %v468, %v489
    %v492 = vunpack.c.l.s4 1983009808
    %v493 = vunpack.c.0.s8 %v492
    %v494 = vlaneseq
    %v495 = vshrl.u32 %v494, 7
    %v496 = vsub.s32 %v493, %v495
    %v497 = vrot.slane %v469, %v496
    %v498 = vcombine.low %v476, %v490
    %v499 = vcombine.high %v476, %v490
    %v500 = vcombine.low %v483, %v497
    %v501 = vcombine.high %v483, %v497
    %v502 = vcombine.low %v83, %v91
    %v503 = vcombine.high %v83, %v91
    %v504 = vcombine.low %v99, %v107
    %v505 = vcombine.high %v99, %v107
    %v507 = vunpack.c.l.s4 1983009808
    %v508 = vunpack.c.0.s8 %v507
    %v509 = vlaneseq
    %v510 = vshrl.u32 %v509, 7
    %v511 = vsub.s32 %v508, %v510
    %v512 = vrot.slane %v502, %v511
    %v514 = vunpack.c.l.s4 1983009808
    %v515 = vunpack.c.0.s8 %v514
    %v516 = vlaneseq
    %v517 = vshrl.u32 %v516, 7
    %v518 = vsub.s32 %v515, %v517
    %v519 = vrot.slane %v503, %v518
    %v521 = vunpack.c.l.s4 1983009808
    %v522 = vunpack.c.0.s8 %v521
    %v523 = vlaneseq
    %v524 = vshrl.u32 %v523, 7
    %v525 = vsub.s32 %v522, %v524
    %v526 = vrot.slane %v504, %v525
    %v528 = vunpack.c.l.s4 1983009808
    %v529 = vunpack.c.0.s8 %v528
    %v530 = vlaneseq
    %v531 = vshrl.u32 %v530, 7
    %v532 = vsub.s32 %v529, %v531
    %v533 = vrot.slane %v505, %v532
    %v534 = vcombine.low %v512, %v526
    %v535 = vcombine.high %v512, %v526
    %v536 = vcombine.low %v519, %v533
    %v537 = vcombine.high %v519, %v533
    %v538 = vcombine.low %v84, %v92
    %v539 = vcombine.high %v84, %v92
    %v540 = vcombine.low %v100, %v108
    %v541 = vcombine.high %v100, %v108
    %v543 = vunpack.c.l.s4 1983009808
    %v544 = vunpack.c.0.s8 %v543
    %v545 = vlaneseq
    %v546 = vshrl.u32 %v545, 7
    %v547 = vsub.s32 %v544, %v546
    %v548 = vrot.slane %v538, %v547
    %v550 = vunpack.c.l.s4 1983009808
    %v551 = vunpack.c.0.s8 %v550
    %v552 = vlaneseq
    %v553 = vshrl.u32 %v552, 7
    %v554 = vsub.s32 %v551, %v553
    %v555 = vrot.slane %v539, %v554
    %v557 = vunpack.c.l.s4 1983009808
    %v558 = vunpack.c.0.s8 %v557
    %v559 = vlaneseq
    %v560 = vshrl.u32 %v559, 7
    %v561 = vsub.s32 %v558, %v560
    %v562 = vrot.slane %v540, %v561
    %v564 = vunpack.c.l.s4 1983009808
    %v565 = vunpack.c.0.s8 %v564
    %v566 = vlaneseq
    %v567 = vshrl.u32 %v566, 7
    %v568 = vsub.s32 %v565, %v567
    %v569 = vrot.slane %v541, %v568
    %v570 = vcombine.low %v548, %v562
    %v571 = vcombine.high %v548, %v562
    %v572 = vcombine.low %v555, %v569
    %v573 = vcombine.high %v555, %v569
    %v574 = vcombine.low %v85, %v93
    %v575 = vcombine.high %v85, %v93
    %v576 = vcombine.low %v101, %v109
    %v577 = vcombine.high %v101, %v109
    %v579 = vunpack.c.l.s4 1983009808
    %v580 = vunpack.c.0.s8 %v579
    %v581 = vlaneseq
    %v582 = vshrl.u32 %v581, 7
    %v583 = vsub.s32 %v580, %v582
    %v584 = vrot.slane %v574, %v583
    %v586 = vunpack.c.l.s4 1983009808
    %v587 = vunpack.c.0.s8 %v586
    %v588 = vlaneseq
    %v589 = vshrl.u32 %v588, 7
    %v590 = vsub.s32 %v587, %v589
    %v591 = vrot.slane %v575, %v590
    %v593 = vunpack.c.l.s4 1983009808
    %v594 = vunpack.c.0.s8 %v593
    %v595 = vlaneseq
    %v596 = vshrl.u32 %v595, 7
    %v597 = vsub.s32 %v594, %v596
    %v598 = vrot.slane %v576, %v597
    %v600 = vunpack.c.l.s4 1983009808
    %v601 = vunpack.c.0.s8 %v600
    %v602 = vlaneseq
    %v603 = vshrl.u32 %v602, 7
    %v604 = vsub.s32 %v601, %v603
    %v605 = vrot.slane %v577, %v604
    %v606 = vcombine.low %v584, %v598
    %v607 = vcombine.high %v584, %v598
    %v608 = vcombine.low %v591, %v605
    %v609 = vcombine.high %v591, %v605
    %v610 = vcombine.low %v86, %v94
    %v611 = vcombine.high %v86, %v94
    %v612 = vcombine.low %v102, %v110
    %v613 = vcombine.high %v102, %v110
    %v615 = vunpack.c.l.s4 1983009808
    %v616 = vunpack.c.0.s8 %v615
    %v617 = vlaneseq
    %v618 = vshrl.u32 %v617, 7
    %v619 = vsub.s32 %v616, %v618
    %v620 = vrot.slane %v610, %v619
    %v622 = vunpack.c.l.s4 1983009808
    %v623 = vunpack.c.0.s8 %v622
    %v624 = vlaneseq
    %v625 = vshrl.u32 %v624, 7
    %v626 = vsub.s32 %v623, %v625
    %v627 = vrot.slane %v611, %v626
    %v629 = vunpack.c.l.s4 1983009808
    %v630 = vunpack.c.0.s8 %v629
    %v631 = vlaneseq
    %v632 = vshrl.u32 %v631, 7
    %v633 = vsub.s32 %v630, %v632
    %v634 = vrot.slane %v612, %v633
    %v636 = vunpack.c.l.s4 1983009808
    %v637 = vunpack.c.0.s8 %v636
    %v638 = vlaneseq
    %v639 = vshrl.u32 %v638, 7
    %v640 = vsub.s32 %v637, %v639
    %v641 = vrot.slane %v613, %v640
    %v642 = vcombine.low %v620, %v634
    %v643 = vcombine.high %v620, %v634
    %v644 = vcombine.low %v627, %v641
    %v645 = vcombine.high %v627, %v641
    %v646 = vcombine.low %v87, %v95
    %v647 = vcombine.high %v87, %v95
    %v648 = vcombine.low %v103, %v111
    %v649 = vcombine.high %v103, %v111
    %v651 = vunpack.c.l.s4 1983009808
    %v652 = vunpack.c.0.s8 %v651
    %v653 = vlaneseq
    %v654 = vshrl.u32 %v653, 7
    %v655 = vsub.s32 %v652, %v654
    %v656 = vrot.slane %v646, %v655
    %v658 = vunpack.c.l.s4 1983009808
    %v659 = vunpack.c.0.s8 %v658
    %v660 = vlaneseq
    %v661 = vshrl.u32 %v660, 7
    %v662 = vsub.s32 %v659, %v661
    %v663 = vrot.slane %v647, %v662
    %v665 = vunpack.c.l.s4 1983009808
    %v666 = vunpack.c.0.s8 %v665
    %v667 = vlaneseq
    %v668 = vshrl.u32 %v667, 7
    %v669 = vsub.s32 %v666, %v668
    %v670 = vrot.slane %v648, %v669
    %v672 = vunpack.c.l.s4 1983009808
    %v673 = vunpack.c.0.s8 %v672
    %v674 = vlaneseq
    %v675 = vshrl.u32 %v674, 7
    %v676 = vsub.s32 %v673, %v675
    %v677 = vrot.slane %v649, %v676
    %v678 = vcombine.low %v656, %v670
    %v679 = vcombine.high %v656, %v670
    %v680 = vcombine.low %v663, %v677
    %v681 = vcombine.high %v663, %v677
    %v682 = vcombine.low %v88, %v96
    %v683 = vcombine.high %v88, %v96
    %v684 = vcombine.low %v104, %v112
    %v685 = vcombine.high %v104, %v112
    %v687 = vunpack.c.l.s4 1983009808
    %v688 = vunpack.c.0.s8 %v687
    %v689 = vlaneseq
    %v690 = vshrl.u32 %v689, 7
    %v691 = vsub.s32 %v688, %v690
    %v692 = vrot.slane %v682, %v691
    %v694 = vunpack.c.l.s4 1983009808
    %v695 = vunpack.c.0.s8 %v694
    %v696 = vlaneseq
    %v697 = vshrl.u32 %v696, 7
    %v698 = vsub.s32 %v695, %v697
    %v699 = vrot.slane %v683, %v698
    %v701 = vunpack.c.l.s4 1983009808
    %v702 = vunpack.c.0.s8 %v701
    %v703 = vlaneseq
    %v704 = vshrl.u32 %v703, 7
    %v705 = vsub.s32 %v702, %v704
    %v706 = vrot.slane %v684, %v705
    %v708 = vunpack.c.l.s4 1983009808
    %v709 = vunpack.c.0.s8 %v708
    %v710 = vlaneseq
    %v711 = vshrl.u32 %v710, 7
    %v712 = vsub.s32 %v709, %v711
    %v713 = vrot.slane %v685, %v712
    %v714 = vcombine.low %v692, %v706
    %v715 = vcombine.high %v692, %v706
    %v716 = vcombine.low %v699, %v713
    %v717 = vcombine.high %v699, %v713
    %v718 = vcombine.low %v89, %v97
    %v719 = vcombine.high %v89, %v97
    %v720 = vcombine.low %v105, %v113
    %v721 = vcombine.high %v105, %v113
    %v723 = vunpack.c.l.s4 1983009808
    %v724 = vunpack.c.0.s8 %v723
    %v725 = vlaneseq
    %v726 = vshrl.u32 %v725, 7
    %v727 = vsub.s32 %v724, %v726
    %v728 = vrot.slane %v718, %v727
    %v730 = vunpack.c.l.s4 1983009808
    %v731 = vunpack.c.0.s8 %v730
    %v732 = vlaneseq
    %v733 = vshrl.u32 %v732, 7
    %v734 = vsub.s32 %v731, %v733
    %v735 = vrot.slane %v719, %v734
    %v737 = vunpack.c.l.s4 1983009808
    %v738 = vunpack.c.0.s8 %v737
    %v739 = vlaneseq
    %v740 = vshrl.u32 %v739, 7
    %v741 = vsub.s32 %v738, %v740
    %v742 = vrot.slane %v720, %v741
    %v744 = vunpack.c.l.s4 1983009808
    %v745 = vunpack.c.0.s8 %v744
    %v746 = vlaneseq
    %v747 = vshrl.u32 %v746, 7
    %v748 = vsub.s32 %v745, %v747
    %v749 = vrot.slane %v721, %v748
    %v750 = vcombine.low %v728, %v742
    %v751 = vcombine.high %v728, %v742
    %v752 = vcombine.low %v735, %v749
    %v753 = vcombine.high %v735, %v749
    %v818 = vpack.c.bf16 %v498, %v210
    %v819 = vpack.c.bf16 %v499, %v211
    %v820 = vpack.c.bf16 %v500, %v212
    %v821 = vpack.c.bf16 %v501, %v213
    %v822 = vpack.c.bf16 %v534, %v246
    %v823 = vpack.c.bf16 %v535, %v247
    %v824 = vpack.c.bf16 %v536, %v248
    %v825 = vpack.c.bf16 %v537, %v249
    %v826 = vpack.c.bf16 %v570, %v282
    %v827 = vpack.c.bf16 %v571, %v283
    %v828 = vpack.c.bf16 %v572, %v284
    %v829 = vpack.c.bf16 %v573, %v285
    %v830 = vpack.c.bf16 %v606, %v318
    %v831 = vpack.c.bf16 %v607, %v319
    %v832 = vpack.c.bf16 %v608, %v320
    %v833 = vpack.c.bf16 %v609, %v321
    %v834 = vpack.c.bf16 %v642, %v354
    %v835 = vpack.c.bf16 %v643, %v355
    %v836 = vpack.c.bf16 %v644, %v356
    %v837 = vpack.c.bf16 %v645, %v357
    %v838 = vpack.c.bf16 %v678, %v390
    %v839 = vpack.c.bf16 %v679, %v391
    %v840 = vpack.c.bf16 %v680, %v392
    %v841 = vpack.c.bf16 %v681, %v393
    %v842 = vpack.c.bf16 %v714, %v426
    %v843 = vpack.c.bf16 %v715, %v427
    %v844 = vpack.c.bf16 %v716, %v428
    %v845 = vpack.c.bf16 %v717, %v429
    %v846 = vpack.c.bf16 %v750, %v462
    %v847 = vpack.c.bf16 %v751, %v463
    %v848 = vpack.c.bf16 %v752, %v464
    %v849 = vpack.c.bf16 %v753, %v465
    %v850 = vld [vmem:[#allocation5] sm:$0xf]
    %v851 = vld [vmem:[#allocation5 + $0x4] sm:$0xf]
    %v852 = vld [vmem:[#allocation5 + $0x8] sm:$0xf]
    %v853 = vld [vmem:[#allocation5 + $0xc] sm:$0xf]
    %v854 = vld [vmem:[#allocation5 + $0x10] sm:$0xf]
    %v855 = vld [vmem:[#allocation5 + $0x14] sm:$0xf]
    %v856 = vld [vmem:[#allocation5 + $0x18] sm:$0xf]
    %v857 = vld [vmem:[#allocation5 + $0x1c] sm:$0xf]
    %v858 = vld [vmem:[#allocation5 + $0x20] sm:$0xf]
    %v859 = vld [vmem:[#allocation5 + $0x24] sm:$0xf]
    %v860 = vld [vmem:[#allocation5 + $0x28] sm:$0xf]
    %v861 = vld [vmem:[#allocation5 + $0x2c] sm:$0xf]
    %v862 = vld [vmem:[#allocation5 + $0x30] sm:$0xf]
    %v863 = vld [vmem:[#allocation5 + $0x34] sm:$0xf]
    %v864 = vld [vmem:[#allocation5 + $0x38] sm:$0xf]
    %v865 = vld [vmem:[#allocation5 + $0x3c] sm:$0xf]
    %v866 = vld [vmem:[#allocation5 + $0x40] sm:$0xf]
    %v867 = vld [vmem:[#allocation5 + $0x44] sm:$0xf]
    %v868 = vld [vmem:[#allocation5 + $0x48] sm:$0xf]
    %v869 = vld [vmem:[#allocation5 + $0x4c] sm:$0xf]
    %v870 = vld [vmem:[#allocation5 + $0x50] sm:$0xf]
    %v871 = vld [vmem:[#allocation5 + $0x54] sm:$0xf]
    %v872 = vld [vmem:[#allocation5 + $0x58] sm:$0xf]
    %v873 = vld [vmem:[#allocation5 + $0x5c] sm:$0xf]
    %v874 = vld [vmem:[#allocation5 + $0x60] sm:$0xf]
    %v875 = vld [vmem:[#allocation5 + $0x64] sm:$0xf]
    %v876 = vld [vmem:[#allocation5 + $0x68] sm:$0xf]
    %v877 = vld [vmem:[#allocation5 + $0x6c] sm:$0xf]
    %v878 = vld [vmem:[#allocation5 + $0x70] sm:$0xf]
    %v879 = vld [vmem:[#allocation5 + $0x74] sm:$0xf]
    %v880 = vld [vmem:[#allocation5 + $0x78] sm:$0xf]
    %v881 = vld [vmem:[#allocation5 + $0x7c] sm:$0xf]
    %v882 = vld [vmem:[#allocation5 + $0x80] sm:$0xf]
    %v883 = vld [vmem:[#allocation5 + $0x84] sm:$0xf]
    %v884 = vld [vmem:[#allocation5 + $0x88] sm:$0xf]
    %v885 = vld [vmem:[#allocation5 + $0x8c] sm:$0xf]
    %v886 = vld [vmem:[#allocation5 + $0x90] sm:$0xf]
    %v887 = vld [vmem:[#allocation5 + $0x94] sm:$0xf]
    %v888 = vld [vmem:[#allocation5 + $0x98] sm:$0xf]
    %v889 = vld [vmem:[#allocation5 + $0x9c] sm:$0xf]
    %v890 = vld [vmem:[#allocation5 + $0xa0] sm:$0xf]
    %v891 = vld [vmem:[#allocation5 + $0xa4] sm:$0xf]
    %v892 = vld [vmem:[#allocation5 + $0xa8] sm:$0xf]
    %v893 = vld [vmem:[#allocation5 + $0xac] sm:$0xf]
    %v894 = vld [vmem:[#allocation5 + $0xb0] sm:$0xf]
    %v895 = vld [vmem:[#allocation5 + $0xb4] sm:$0xf]
    %v896 = vld [vmem:[#allocation5 + $0xb8] sm:$0xf]
    %v897 = vld [vmem:[#allocation5 + $0xbc] sm:$0xf]
    %v898 = vld [vmem:[#allocation5 + $0xc0] sm:$0xf]
    %v899 = vld [vmem:[#allocation5 + $0xc4] sm:$0xf]
    %v900 = vld [vmem:[#allocation5 + $0xc8] sm:$0xf]
    %v901 = vld [vmem:[#allocation5 + $0xcc] sm:$0xf]
    %v902 = vld [vmem:[#allocation5 + $0xd0] sm:$0xf]
    %v903 = vld [vmem:[#allocation5 + $0xd4] sm:$0xf]
    %v904 = vld [vmem:[#allocation5 + $0xd8] sm:$0xf]
    %v905 = vld [vmem:[#allocation5 + $0xdc] sm:$0xf]
    %v906 = vld [vmem:[#allocation5 + $0xe0] sm:$0xf]
    %v907 = vld [vmem:[#allocation5 + $0xe4] sm:$0xf]
    %v908 = vld [vmem:[#allocation5 + $0xe8] sm:$0xf]
    %v909 = vld [vmem:[#allocation5 + $0xec] sm:$0xf]
    %v910 = vld [vmem:[#allocation5 + $0xf0] sm:$0xf]
    %v911 = vld [vmem:[#allocation5 + $0xf4] sm:$0xf]
    %v912 = vld [vmem:[#allocation5 + $0xf8] sm:$0xf]
    %v913 = vld [vmem:[#allocation5 + $0xfc] sm:$0xf]
    %v914 = vld [vmem:[#allocation5 + $0x100] sm:$0xf]
    %v915 = vld [vmem:[#allocation5 + $0x104] sm:$0xf]
    %v916 = vld [vmem:[#allocation5 + $0x108] sm:$0xf]
    %v917 = vld [vmem:[#allocation5 + $0x10c] sm:$0xf]
    %v918 = vld [vmem:[#allocation5 + $0x110] sm:$0xf]
    %v919 = vld [vmem:[#allocation5 + $0x114] sm:$0xf]
    %v920 = vld [vmem:[#allocation5 + $0x118] sm:$0xf]
    %v921 = vld [vmem:[#allocation5 + $0x11c] sm:$0xf]
    %v922 = vld [vmem:[#allocation5 + $0x120] sm:$0xf]
    %v923 = vld [vmem:[#allocation5 + $0x124] sm:$0xf]
    %v924 = vld [vmem:[#allocation5 + $0x128] sm:$0xf]
    %v925 = vld [vmem:[#allocation5 + $0x12c] sm:$0xf]
    %v926 = vld [vmem:[#allocation5 + $0x130] sm:$0xf]
    %v927 = vld [vmem:[#allocation5 + $0x134] sm:$0xf]
    %v928 = vld [vmem:[#allocation5 + $0x138] sm:$0xf]
    %v929 = vld [vmem:[#allocation5 + $0x13c] sm:$0xf]
    %v930 = vld [vmem:[#allocation5 + $0x140] sm:$0xf]
    %v931 = vld [vmem:[#allocation5 + $0x144] sm:$0xf]
    %v932 = vld [vmem:[#allocation5 + $0x148] sm:$0xf]
    %v933 = vld [vmem:[#allocation5 + $0x14c] sm:$0xf]
    %v934 = vld [vmem:[#allocation5 + $0x150] sm:$0xf]
    %v935 = vld [vmem:[#allocation5 + $0x154] sm:$0xf]
    %v936 = vld [vmem:[#allocation5 + $0x158] sm:$0xf]
    %v937 = vld [vmem:[#allocation5 + $0x15c] sm:$0xf]
    %v938 = vld [vmem:[#allocation5 + $0x160] sm:$0xf]
    %v939 = vld [vmem:[#allocation5 + $0x164] sm:$0xf]
    %v940 = vld [vmem:[#allocation5 + $0x168] sm:$0xf]
    %v941 = vld [vmem:[#allocation5 + $0x16c] sm:$0xf]
    %v942 = vld [vmem:[#allocation5 + $0x170] sm:$0xf]
    %v943 = vld [vmem:[#allocation5 + $0x174] sm:$0xf]
    %v944 = vld [vmem:[#allocation5 + $0x178] sm:$0xf]
    %v945 = vld [vmem:[#allocation5 + $0x17c] sm:$0xf]
    %v946 = vld [vmem:[#allocation5 + $0x180] sm:$0xf]
    %v947 = vld [vmem:[#allocation5 + $0x184] sm:$0xf]
    %v948 = vld [vmem:[#allocation5 + $0x188] sm:$0xf]
    %v949 = vld [vmem:[#allocation5 + $0x18c] sm:$0xf]
    %v950 = vld [vmem:[#allocation5 + $0x190] sm:$0xf]
    %v951 = vld [vmem:[#allocation5 + $0x194] sm:$0xf]
    %v952 = vld [vmem:[#allocation5 + $0x198] sm:$0xf]
    %v953 = vld [vmem:[#allocation5 + $0x19c] sm:$0xf]
    %v954 = vld [vmem:[#allocation5 + $0x1a0] sm:$0xf]
    %v955 = vld [vmem:[#allocation5 + $0x1a4] sm:$0xf]
    %v956 = vld [vmem:[#allocation5 + $0x1a8] sm:$0xf]
    %v957 = vld [vmem:[#allocation5 + $0x1ac] sm:$0xf]
    %v958 = vld [vmem:[#allocation5 + $0x1b0] sm:$0xf]
    %v959 = vld [vmem:[#allocation5 + $0x1b4] sm:$0xf]
    %v960 = vld [vmem:[#allocation5 + $0x1b8] sm:$0xf]
    %v961 = vld [vmem:[#allocation5 + $0x1bc] sm:$0xf]
    %v962 = vld [vmem:[#allocation5 + $0x1c0] sm:$0xf]
    %v963 = vld [vmem:[#allocation5 + $0x1c4] sm:$0xf]
    %v964 = vld [vmem:[#allocation5 + $0x1c8] sm:$0xf]
    %v965 = vld [vmem:[#allocation5 + $0x1cc] sm:$0xf]
    %v966 = vld [vmem:[#allocation5 + $0x1d0] sm:$0xf]
    %v967 = vld [vmem:[#allocation5 + $0x1d4] sm:$0xf]
    %v968 = vld [vmem:[#allocation5 + $0x1d8] sm:$0xf]
    %v969 = vld [vmem:[#allocation5 + $0x1dc] sm:$0xf]
    %v970 = vld [vmem:[#allocation5 + $0x1e0] sm:$0xf]
    %v971 = vld [vmem:[#allocation5 + $0x1e4] sm:$0xf]
    %v972 = vld [vmem:[#allocation5 + $0x1e8] sm:$0xf]
    %v973 = vld [vmem:[#allocation5 + $0x1ec] sm:$0xf]
    %v974 = vld [vmem:[#allocation5 + $0x1f0] sm:$0xf]
    %v975 = vld [vmem:[#allocation5 + $0x1f4] sm:$0xf]
    %v976 = vld [vmem:[#allocation5 + $0x1f8] sm:$0xf]
    %v977 = vld [vmem:[#allocation5 + $0x1fc] sm:$0xf]
    %v978 = vld [vmem:[#allocation5 + $0x200] sm:$0xf]
    %v979 = vld [vmem:[#allocation5 + $0x204] sm:$0xf]
    %v980 = vld [vmem:[#allocation5 + $0x208] sm:$0xf]
    %v981 = vld [vmem:[#allocation5 + $0x20c] sm:$0xf]
    %v982 = vld [vmem:[#allocation5 + $0x210] sm:$0xf]
    %v983 = vld [vmem:[#allocation5 + $0x214] sm:$0xf]
    %v984 = vld [vmem:[#allocation5 + $0x218] sm:$0xf]
    %v985 = vld [vmem:[#allocation5 + $0x21c] sm:$0xf]
    %v986 = vld [vmem:[#allocation5 + $0x220] sm:$0xf]
    %v987 = vld [vmem:[#allocation5 + $0x224] sm:$0xf]
    %v988 = vld [vmem:[#allocation5 + $0x228] sm:$0xf]
    %v989 = vld [vmem:[#allocation5 + $0x22c] sm:$0xf]
    %v990 = vld [vmem:[#allocation5 + $0x230] sm:$0xf]
    %v991 = vld [vmem:[#allocation5 + $0x234] sm:$0xf]
    %v992 = vld [vmem:[#allocation5 + $0x238] sm:$0xf]
    %v993 = vld [vmem:[#allocation5 + $0x23c] sm:$0xf]
    %v994 = vld [vmem:[#allocation5 + $0x240] sm:$0xf]
    %v995 = vld [vmem:[#allocation5 + $0x244] sm:$0xf]
    %v996 = vld [vmem:[#allocation5 + $0x248] sm:$0xf]
    %v997 = vld [vmem:[#allocation5 + $0x24c] sm:$0xf]
    %v998 = vld [vmem:[#allocation5 + $0x250] sm:$0xf]
    %v999 = vld [vmem:[#allocation5 + $0x254] sm:$0xf]
    %v1000 = vld [vmem:[#allocation5 + $0x258] sm:$0xf]
    %v1001 = vld [vmem:[#allocation5 + $0x25c] sm:$0xf]
    %v1002 = vld [vmem:[#allocation5 + $0x260] sm:$0xf]
    %v1003 = vld [vmem:[#allocation5 + $0x264] sm:$0xf]
    %v1004 = vld [vmem:[#allocation5 + $0x268] sm:$0xf]
    %v1005 = vld [vmem:[#allocation5 + $0x26c] sm:$0xf]
    %v1006 = vld [vmem:[#allocation5 + $0x270] sm:$0xf]
    %v1007 = vld [vmem:[#allocation5 + $0x274] sm:$0xf]
    %v1008 = vld [vmem:[#allocation5 + $0x278] sm:$0xf]
    %v1009 = vld [vmem:[#allocation5 + $0x27c] sm:$0xf]
    %v1010 = vld [vmem:[#allocation5 + $0x280] sm:$0xf]
    %v1011 = vld [vmem:[#allocation5 + $0x284] sm:$0xf]
    %v1012 = vld [vmem:[#allocation5 + $0x288] sm:$0xf]
    %v1013 = vld [vmem:[#allocation5 + $0x28c] sm:$0xf]
    %v1014 = vld [vmem:[#allocation5 + $0x290] sm:$0xf]
    %v1015 = vld [vmem:[#allocation5 + $0x294] sm:$0xf]
    %v1016 = vld [vmem:[#allocation5 + $0x298] sm:$0xf]
    %v1017 = vld [vmem:[#allocation5 + $0x29c] sm:$0xf]
    %v1018 = vld [vmem:[#allocation5 + $0x2a0] sm:$0xf]
    %v1019 = vld [vmem:[#allocation5 + $0x2a4] sm:$0xf]
    %v1020 = vld [vmem:[#allocation5 + $0x2a8] sm:$0xf]
    %v1021 = vld [vmem:[#allocation5 + $0x2ac] sm:$0xf]
    %v1022 = vld [vmem:[#allocation5 + $0x2b0] sm:$0xf]
    %v1023 = vld [vmem:[#allocation5 + $0x2b4] sm:$0xf]
    %v1024 = vld [vmem:[#allocation5 + $0x2b8] sm:$0xf]
    %v1025 = vld [vmem:[#allocation5 + $0x2bc] sm:$0xf]
    %v1026 = vld [vmem:[#allocation5 + $0x2c0] sm:$0xf]
    %v1027 = vld [vmem:[#allocation5 + $0x2c4] sm:$0xf]
    %v1028 = vld [vmem:[#allocation5 + $0x2c8] sm:$0xf]
    %v1029 = vld [vmem:[#allocation5 + $0x2cc] sm:$0xf]
    %v1030 = vld [vmem:[#allocation5 + $0x2d0] sm:$0xf]
    %v1031 = vld [vmem:[#allocation5 + $0x2d4] sm:$0xf]
    %v1032 = vld [vmem:[#allocation5 + $0x2d8] sm:$0xf]
    %v1033 = vld [vmem:[#allocation5 + $0x2dc] sm:$0xf]
    %v1034 = vld [vmem:[#allocation5 + $0x2e0] sm:$0xf]
    %v1035 = vld [vmem:[#allocation5 + $0x2e4] sm:$0xf]
    %v1036 = vld [vmem:[#allocation5 + $0x2e8] sm:$0xf]
    %v1037 = vld [vmem:[#allocation5 + $0x2ec] sm:$0xf]
    %v1038 = vld [vmem:[#allocation5 + $0x2f0] sm:$0xf]
    %v1039 = vld [vmem:[#allocation5 + $0x2f4] sm:$0xf]
    %v1040 = vld [vmem:[#allocation5 + $0x2f8] sm:$0xf]
    %v1041 = vld [vmem:[#allocation5 + $0x2fc] sm:$0xf]
    %v1042 = vld [vmem:[#allocation5 + $0x300] sm:$0xf]
    %v1043 = vld [vmem:[#allocation5 + $0x304] sm:$0xf]
    %v1044 = vld [vmem:[#allocation5 + $0x308] sm:$0xf]
    %v1045 = vld [vmem:[#allocation5 + $0x30c] sm:$0xf]
    %v1046 = vld [vmem:[#allocation5 + $0x310] sm:$0xf]
    %v1047 = vld [vmem:[#allocation5 + $0x314] sm:$0xf]
    %v1048 = vld [vmem:[#allocation5 + $0x318] sm:$0xf]
    %v1049 = vld [vmem:[#allocation5 + $0x31c] sm:$0xf]
    %v1050 = vld [vmem:[#allocation5 + $0x320] sm:$0xf]
    %v1051 = vld [vmem:[#allocation5 + $0x324] sm:$0xf]
    %v1052 = vld [vmem:[#allocation5 + $0x328] sm:$0xf]
    %v1053 = vld [vmem:[#allocation5 + $0x32c] sm:$0xf]
    %v1054 = vld [vmem:[#allocation5 + $0x330] sm:$0xf]
    %v1055 = vld [vmem:[#allocation5 + $0x334] sm:$0xf]
    %v1056 = vld [vmem:[#allocation5 + $0x338] sm:$0xf]
    %v1057 = vld [vmem:[#allocation5 + $0x33c] sm:$0xf]
    %v1058 = vld [vmem:[#allocation5 + $0x340] sm:$0xf]
    %v1059 = vld [vmem:[#allocation5 + $0x344] sm:$0xf]
    %v1060 = vld [vmem:[#allocation5 + $0x348] sm:$0xf]
    %v1061 = vld [vmem:[#allocation5 + $0x34c] sm:$0xf]
    %v1062 = vld [vmem:[#allocation5 + $0x350] sm:$0xf]
    %v1063 = vld [vmem:[#allocation5 + $0x354] sm:$0xf]
    %v1064 = vld [vmem:[#allocation5 + $0x358] sm:$0xf]
    %v1065 = vld [vmem:[#allocation5 + $0x35c] sm:$0xf]
    %v1066 = vld [vmem:[#allocation5 + $0x360] sm:$0xf]
    %v1067 = vld [vmem:[#allocation5 + $0x364] sm:$0xf]
    %v1068 = vld [vmem:[#allocation5 + $0x368] sm:$0xf]
    %v1069 = vld [vmem:[#allocation5 + $0x36c] sm:$0xf]
    %v1070 = vld [vmem:[#allocation5 + $0x370] sm:$0xf]
    %v1071 = vld [vmem:[#allocation5 + $0x374] sm:$0xf]
    %v1072 = vld [vmem:[#allocation5 + $0x378] sm:$0xf]
    %v1073 = vld [vmem:[#allocation5 + $0x37c] sm:$0xf]
    %v1074 = vld [vmem:[#allocation5 + $0x380] sm:$0xf]
    %v1075 = vld [vmem:[#allocation5 + $0x384] sm:$0xf]
    %v1076 = vld [vmem:[#allocation5 + $0x388] sm:$0xf]
    %v1077 = vld [vmem:[#allocation5 + $0x38c] sm:$0xf]
    %v1078 = vld [vmem:[#allocation5 + $0x390] sm:$0xf]
    %v1079 = vld [vmem:[#allocation5 + $0x394] sm:$0xf]
    %v1080 = vld [vmem:[#allocation5 + $0x398] sm:$0xf]
    %v1081 = vld [vmem:[#allocation5 + $0x39c] sm:$0xf]
    %v1082 = vld [vmem:[#allocation5 + $0x3a0] sm:$0xf]
    %v1083 = vld [vmem:[#allocation5 + $0x3a4] sm:$0xf]
    %v1084 = vld [vmem:[#allocation5 + $0x3a8] sm:$0xf]
    %v1085 = vld [vmem:[#allocation5 + $0x3ac] sm:$0xf]
    %v1086 = vld [vmem:[#allocation5 + $0x3b0] sm:$0xf]
    %v1087 = vld [vmem:[#allocation5 + $0x3b4] sm:$0xf]
    %v1088 = vld [vmem:[#allocation5 + $0x3b8] sm:$0xf]
    %v1089 = vld [vmem:[#allocation5 + $0x3bc] sm:$0xf]
    %v1090 = vld [vmem:[#allocation5 + $0x3c0] sm:$0xf]
    %v1091 = vld [vmem:[#allocation5 + $0x3c4] sm:$0xf]
    %v1092 = vld [vmem:[#allocation5 + $0x3c8] sm:$0xf]
    %v1093 = vld [vmem:[#allocation5 + $0x3cc] sm:$0xf]
    %v1094 = vld [vmem:[#allocation5 + $0x3d0] sm:$0xf]
    %v1095 = vld [vmem:[#allocation5 + $0x3d4] sm:$0xf]
    %v1096 = vld [vmem:[#allocation5 + $0x3d8] sm:$0xf]
    %v1097 = vld [vmem:[#allocation5 + $0x3dc] sm:$0xf]
    %v1098 = vld [vmem:[#allocation5 + $0x3e0] sm:$0xf]
    %v1099 = vld [vmem:[#allocation5 + $0x3e4] sm:$0xf]
    %v1100 = vld [vmem:[#allocation5 + $0x3e8] sm:$0xf]
    %v1101 = vld [vmem:[#allocation5 + $0x3ec] sm:$0xf]
    %v1102 = vld [vmem:[#allocation5 + $0x3f0] sm:$0xf]
    %v1103 = vld [vmem:[#allocation5 + $0x3f4] sm:$0xf]
    %v1104 = vld [vmem:[#allocation5 + $0x3f8] sm:$0xf]
    %v1105 = vld [vmem:[#allocation5 + $0x3fc] sm:$0xf]
    %v1106 = vld [vmem:[#allocation5 + $0x400] sm:$0xf]
    %v1107 = vld [vmem:[#allocation5 + $0x404] sm:$0xf]
    %v1108 = vld [vmem:[#allocation5 + $0x408] sm:$0xf]
    %v1109 = vld [vmem:[#allocation5 + $0x40c] sm:$0xf]
    %v1110 = vld [vmem:[#allocation5 + $0x410] sm:$0xf]
    %v1111 = vld [vmem:[#allocation5 + $0x414] sm:$0xf]
    %v1112 = vld [vmem:[#allocation5 + $0x418] sm:$0xf]
    %v1113 = vld [vmem:[#allocation5 + $0x41c] sm:$0xf]
    %v1114 = vld [vmem:[#allocation5 + $0x420] sm:$0xf]
    %v1115 = vld [vmem:[#allocation5 + $0x424] sm:$0xf]
    %v1116 = vld [vmem:[#allocation5 + $0x428] sm:$0xf]
    %v1117 = vld [vmem:[#allocation5 + $0x42c] sm:$0xf]
    %v1118 = vld [vmem:[#allocation5 + $0x430] sm:$0xf]
    %v1119 = vld [vmem:[#allocation5 + $0x434] sm:$0xf]
    %v1120 = vld [vmem:[#allocation5 + $0x438] sm:$0xf]
    %v1121 = vld [vmem:[#allocation5 + $0x43c] sm:$0xf]
    %v1122 = vld [vmem:[#allocation5 + $0x440] sm:$0xf]
    %v1123 = vld [vmem:[#allocation5 + $0x444] sm:$0xf]
    %v1124 = vld [vmem:[#allocation5 + $0x448] sm:$0xf]
    %v1125 = vld [vmem:[#allocation5 + $0x44c] sm:$0xf]
    %v1126 = vld [vmem:[#allocation5 + $0x450] sm:$0xf]
    %v1127 = vld [vmem:[#allocation5 + $0x454] sm:$0xf]
    %v1128 = vld [vmem:[#allocation5 + $0x458] sm:$0xf]
    %v1129 = vld [vmem:[#allocation5 + $0x45c] sm:$0xf]
    %v1130 = vld [vmem:[#allocation5 + $0x460] sm:$0xf]
    %v1131 = vld [vmem:[#allocation5 + $0x464] sm:$0xf]
    %v1132 = vld [vmem:[#allocation5 + $0x468] sm:$0xf]
    %v1133 = vld [vmem:[#allocation5 + $0x46c] sm:$0xf]
    %v1134 = vld [vmem:[#allocation5 + $0x470] sm:$0xf]
    %v1135 = vld [vmem:[#allocation5 + $0x474] sm:$0xf]
    %v1136 = vld [vmem:[#allocation5 + $0x478] sm:$0xf]
    %v1137 = vld [vmem:[#allocation5 + $0x47c] sm:$0xf]
    %v1138 = vld [vmem:[#allocation5 + $0x480] sm:$0xf]
    %v1139 = vld [vmem:[#allocation5 + $0x484] sm:$0xf]
    %v1140 = vld [vmem:[#allocation5 + $0x488] sm:$0xf]
    %v1141 = vld [vmem:[#allocation5 + $0x48c] sm:$0xf]
    %v1142 = vld [vmem:[#allocation5 + $0x490] sm:$0xf]
    %v1143 = vld [vmem:[#allocation5 + $0x494] sm:$0xf]
    %v1144 = vld [vmem:[#allocation5 + $0x498] sm:$0xf]
    %v1145 = vld [vmem:[#allocation5 + $0x49c] sm:$0xf]
    %v1146 = vld [vmem:[#allocation5 + $0x4a0] sm:$0xf]
    %v1147 = vld [vmem:[#allocation5 + $0x4a4] sm:$0xf]
    %v1148 = vld [vmem:[#allocation5 + $0x4a8] sm:$0xf]
    %v1149 = vld [vmem:[#allocation5 + $0x4ac] sm:$0xf]
    %v1150 = vld [vmem:[#allocation5 + $0x4b0] sm:$0xf]
    %v1151 = vld [vmem:[#allocation5 + $0x4b4] sm:$0xf]
    %v1152 = vld [vmem:[#allocation5 + $0x4b8] sm:$0xf]
    %v1153 = vld [vmem:[#allocation5 + $0x4bc] sm:$0xf]
    %v1154 = vld [vmem:[#allocation5 + $0x4c0] sm:$0xf]
    %v1155 = vld [vmem:[#allocation5 + $0x4c4] sm:$0xf]
    %v1156 = vld [vmem:[#allocation5 + $0x4c8] sm:$0xf]
    %v1157 = vld [vmem:[#allocation5 + $0x4cc] sm:$0xf]
    %v1158 = vld [vmem:[#allocation5 + $0x4d0] sm:$0xf]
    %v1159 = vld [vmem:[#allocation5 + $0x4d4] sm:$0xf]
    %v1160 = vld [vmem:[#allocation5 + $0x4d8] sm:$0xf]
    %v1161 = vld [vmem:[#allocation5 + $0x4dc] sm:$0xf]
    %v1162 = vld [vmem:[#allocation5 + $0x4e0] sm:$0xf]
    %v1163 = vld [vmem:[#allocation5 + $0x4e4] sm:$0xf]
    %v1164 = vld [vmem:[#allocation5 + $0x4e8] sm:$0xf]
    %v1165 = vld [vmem:[#allocation5 + $0x4ec] sm:$0xf]
    %v1166 = vld [vmem:[#allocation5 + $0x4f0] sm:$0xf]
    %v1167 = vld [vmem:[#allocation5 + $0x4f4] sm:$0xf]
    %v1168 = vld [vmem:[#allocation5 + $0x4f8] sm:$0xf]
    %v1169 = vld [vmem:[#allocation5 + $0x4fc] sm:$0xf]
    %v1170 = vld [vmem:[#allocation5 + $0x500] sm:$0xf]
    %v1171 = vld [vmem:[#allocation5 + $0x504] sm:$0xf]
    %v1172 = vld [vmem:[#allocation5 + $0x508] sm:$0xf]
    %v1173 = vld [vmem:[#allocation5 + $0x50c] sm:$0xf]
    %v1174 = vld [vmem:[#allocation5 + $0x510] sm:$0xf]
    %v1175 = vld [vmem:[#allocation5 + $0x514] sm:$0xf]
    %v1176 = vld [vmem:[#allocation5 + $0x518] sm:$0xf]
    %v1177 = vld [vmem:[#allocation5 + $0x51c] sm:$0xf]
    %v1178 = vld [vmem:[#allocation5 + $0x520] sm:$0xf]
    %v1179 = vld [vmem:[#allocation5 + $0x524] sm:$0xf]
    %v1180 = vld [vmem:[#allocation5 + $0x528] sm:$0xf]
    %v1181 = vld [vmem:[#allocation5 + $0x52c] sm:$0xf]
    %v1182 = vld [vmem:[#allocation5 + $0x530] sm:$0xf]
    %v1183 = vld [vmem:[#allocation5 + $0x534] sm:$0xf]
    %v1184 = vld [vmem:[#allocation5 + $0x538] sm:$0xf]
    %v1185 = vld [vmem:[#allocation5 + $0x53c] sm:$0xf]
    %v1186 = vld [vmem:[#allocation5 + $0x540] sm:$0xf]
    %v1187 = vld [vmem:[#allocation5 + $0x544] sm:$0xf]
    %v1188 = vld [vmem:[#allocation5 + $0x548] sm:$0xf]
    %v1189 = vld [vmem:[#allocation5 + $0x54c] sm:$0xf]
    %v1190 = vld [vmem:[#allocation5 + $0x550] sm:$0xf]
    %v1191 = vld [vmem:[#allocation5 + $0x554] sm:$0xf]
    %v1192 = vld [vmem:[#allocation5 + $0x558] sm:$0xf]
    %v1193 = vld [vmem:[#allocation5 + $0x55c] sm:$0xf]
    %v1194 = vld [vmem:[#allocation5 + $0x560] sm:$0xf]
    %v1195 = vld [vmem:[#allocation5 + $0x564] sm:$0xf]
    %v1196 = vld [vmem:[#allocation5 + $0x568] sm:$0xf]
    %v1197 = vld [vmem:[#allocation5 + $0x56c] sm:$0xf]
    %v1198 = vld [vmem:[#allocation5 + $0x570] sm:$0xf]
    %v1199 = vld [vmem:[#allocation5 + $0x574] sm:$0xf]
    %v1200 = vld [vmem:[#allocation5 + $0x578] sm:$0xf]
    %v1201 = vld [vmem:[#allocation5 + $0x57c] sm:$0xf]
    %v1202 = vld [vmem:[#allocation5 + $0x580] sm:$0xf]
    %v1203 = vld [vmem:[#allocation5 + $0x584] sm:$0xf]
    %v1204 = vld [vmem:[#allocation5 + $0x588] sm:$0xf]
    %v1205 = vld [vmem:[#allocation5 + $0x58c] sm:$0xf]
    %v1206 = vld [vmem:[#allocation5 + $0x590] sm:$0xf]
    %v1207 = vld [vmem:[#allocation5 + $0x594] sm:$0xf]
    %v1208 = vld [vmem:[#allocation5 + $0x598] sm:$0xf]
    %v1209 = vld [vmem:[#allocation5 + $0x59c] sm:$0xf]
    %v1210 = vld [vmem:[#allocation5 + $0x5a0] sm:$0xf]
    %v1211 = vld [vmem:[#allocation5 + $0x5a4] sm:$0xf]
    %v1212 = vld [vmem:[#allocation5 + $0x5a8] sm:$0xf]
    %v1213 = vld [vmem:[#allocation5 + $0x5ac] sm:$0xf]
    %v1214 = vld [vmem:[#allocation5 + $0x5b0] sm:$0xf]
    %v1215 = vld [vmem:[#allocation5 + $0x5b4] sm:$0xf]
    %v1216 = vld [vmem:[#allocation5 + $0x5b8] sm:$0xf]
    %v1217 = vld [vmem:[#allocation5 + $0x5bc] sm:$0xf]
    %v1218 = vld [vmem:[#allocation5 + $0x5c0] sm:$0xf]
    %v1219 = vld [vmem:[#allocation5 + $0x5c4] sm:$0xf]
    %v1220 = vld [vmem:[#allocation5 + $0x5c8] sm:$0xf]
    %v1221 = vld [vmem:[#allocation5 + $0x5cc] sm:$0xf]
    %v1222 = vld [vmem:[#allocation5 + $0x5d0] sm:$0xf]
    %v1223 = vld [vmem:[#allocation5 + $0x5d4] sm:$0xf]
    %v1224 = vld [vmem:[#allocation5 + $0x5d8] sm:$0xf]
    %v1225 = vld [vmem:[#allocation5 + $0x5dc] sm:$0xf]
    %v1226 = vld [vmem:[#allocation5 + $0x5e0] sm:$0xf]
    %v1227 = vld [vmem:[#allocation5 + $0x5e4] sm:$0xf]
    %v1228 = vld [vmem:[#allocation5 + $0x5e8] sm:$0xf]
    %v1229 = vld [vmem:[#allocation5 + $0x5ec] sm:$0xf]
    %v1230 = vld [vmem:[#allocation5 + $0x5f0] sm:$0xf]
    %v1231 = vld [vmem:[#allocation5 + $0x5f4] sm:$0xf]
    %v1232 = vld [vmem:[#allocation5 + $0x5f8] sm:$0xf]
    %v1233 = vld [vmem:[#allocation5 + $0x5fc] sm:$0xf]
    %v1234 = vld [vmem:[#allocation5 + $0x600] sm:$0xf]
    %v1235 = vld [vmem:[#allocation5 + $0x604] sm:$0xf]
    %v1236 = vld [vmem:[#allocation5 + $0x608] sm:$0xf]
    %v1237 = vld [vmem:[#allocation5 + $0x60c] sm:$0xf]
    %v1238 = vld [vmem:[#allocation5 + $0x610] sm:$0xf]
    %v1239 = vld [vmem:[#allocation5 + $0x614] sm:$0xf]
    %v1240 = vld [vmem:[#allocation5 + $0x618] sm:$0xf]
    %v1241 = vld [vmem:[#allocation5 + $0x61c] sm:$0xf]
    %v1242 = vld [vmem:[#allocation5 + $0x620] sm:$0xf]
    %v1243 = vld [vmem:[#allocation5 + $0x624] sm:$0xf]
    %v1244 = vld [vmem:[#allocation5 + $0x628] sm:$0xf]
    %v1245 = vld [vmem:[#allocation5 + $0x62c] sm:$0xf]
    %v1246 = vld [vmem:[#allocation5 + $0x630] sm:$0xf]
    %v1247 = vld [vmem:[#allocation5 + $0x634] sm:$0xf]
    %v1248 = vld [vmem:[#allocation5 + $0x638] sm:$0xf]
    %v1249 = vld [vmem:[#allocation5 + $0x63c] sm:$0xf]
    %v1250 = vld [vmem:[#allocation5 + $0x640] sm:$0xf]
    %v1251 = vld [vmem:[#allocation5 + $0x644] sm:$0xf]
    %v1252 = vld [vmem:[#allocation5 + $0x648] sm:$0xf]
    %v1253 = vld [vmem:[#allocation5 + $0x64c] sm:$0xf]
    %v1254 = vld [vmem:[#allocation5 + $0x650] sm:$0xf]
    %v1255 = vld [vmem:[#allocation5 + $0x654] sm:$0xf]
    %v1256 = vld [vmem:[#allocation5 + $0x658] sm:$0xf]
    %v1257 = vld [vmem:[#allocation5 + $0x65c] sm:$0xf]
    %v1258 = vld [vmem:[#allocation5 + $0x660] sm:$0xf]
    %v1259 = vld [vmem:[#allocation5 + $0x664] sm:$0xf]
    %v1260 = vld [vmem:[#allocation5 + $0x668] sm:$0xf]
    %v1261 = vld [vmem:[#allocation5 + $0x66c] sm:$0xf]
    %v1262 = vld [vmem:[#allocation5 + $0x670] sm:$0xf]
    %v1263 = vld [vmem:[#allocation5 + $0x674] sm:$0xf]
    %v1264 = vld [vmem:[#allocation5 + $0x678] sm:$0xf]
    %v1265 = vld [vmem:[#allocation5 + $0x67c] sm:$0xf]
    %v1266 = vld [vmem:[#allocation5 + $0x680] sm:$0xf]
    %v1267 = vld [vmem:[#allocation5 + $0x684] sm:$0xf]
    %v1268 = vld [vmem:[#allocation5 + $0x688] sm:$0xf]
    %v1269 = vld [vmem:[#allocation5 + $0x68c] sm:$0xf]
    %v1270 = vld [vmem:[#allocation5 + $0x690] sm:$0xf]
    %v1271 = vld [vmem:[#allocation5 + $0x694] sm:$0xf]
    %v1272 = vld [vmem:[#allocation5 + $0x698] sm:$0xf]
    %v1273 = vld [vmem:[#allocation5 + $0x69c] sm:$0xf]
    %v1274 = vld [vmem:[#allocation5 + $0x6a0] sm:$0xf]
    %v1275 = vld [vmem:[#allocation5 + $0x6a4] sm:$0xf]
    %v1276 = vld [vmem:[#allocation5 + $0x6a8] sm:$0xf]
    %v1277 = vld [vmem:[#allocation5 + $0x6ac] sm:$0xf]
    %v1278 = vld [vmem:[#allocation5 + $0x6b0] sm:$0xf]
    %v1279 = vld [vmem:[#allocation5 + $0x6b4] sm:$0xf]
    %v1280 = vld [vmem:[#allocation5 + $0x6b8] sm:$0xf]
    %v1281 = vld [vmem:[#allocation5 + $0x6bc] sm:$0xf]
    %v1282 = vld [vmem:[#allocation5 + $0x6c0] sm:$0xf]
    %v1283 = vld [vmem:[#allocation5 + $0x6c4] sm:$0xf]
    %v1284 = vld [vmem:[#allocation5 + $0x6c8] sm:$0xf]
    %v1285 = vld [vmem:[#allocation5 + $0x6cc] sm:$0xf]
    %v1286 = vld [vmem:[#allocation5 + $0x6d0] sm:$0xf]
    %v1287 = vld [vmem:[#allocation5 + $0x6d4] sm:$0xf]
    %v1288 = vld [vmem:[#allocation5 + $0x6d8] sm:$0xf]
    %v1289 = vld [vmem:[#allocation5 + $0x6dc] sm:$0xf]
    %v1290 = vld [vmem:[#allocation5 + $0x6e0] sm:$0xf]
    %v1291 = vld [vmem:[#allocation5 + $0x6e4] sm:$0xf]
    %v1292 = vld [vmem:[#allocation5 + $0x6e8] sm:$0xf]
    %v1293 = vld [vmem:[#allocation5 + $0x6ec] sm:$0xf]
    %v1294 = vld [vmem:[#allocation5 + $0x6f0] sm:$0xf]
    %v1295 = vld [vmem:[#allocation5 + $0x6f4] sm:$0xf]
    %v1296 = vld [vmem:[#allocation5 + $0x6f8] sm:$0xf]
    %v1297 = vld [vmem:[#allocation5 + $0x6fc] sm:$0xf]
    %v1298 = vld [vmem:[#allocation5 + $0x700] sm:$0xf]
    %v1299 = vld [vmem:[#allocation5 + $0x704] sm:$0xf]
    %v1300 = vld [vmem:[#allocation5 + $0x708] sm:$0xf]
    %v1301 = vld [vmem:[#allocation5 + $0x70c] sm:$0xf]
    %v1302 = vld [vmem:[#allocation5 + $0x710] sm:$0xf]
    %v1303 = vld [vmem:[#allocation5 + $0x714] sm:$0xf]
    %v1304 = vld [vmem:[#allocation5 + $0x718] sm:$0xf]
    %v1305 = vld [vmem:[#allocation5 + $0x71c] sm:$0xf]
    %v1306 = vld [vmem:[#allocation5 + $0x720] sm:$0xf]
    %v1307 = vld [vmem:[#allocation5 + $0x724] sm:$0xf]
    %v1308 = vld [vmem:[#allocation5 + $0x728] sm:$0xf]
    %v1309 = vld [vmem:[#allocation5 + $0x72c] sm:$0xf]
    %v1310 = vld [vmem:[#allocation5 + $0x730] sm:$0xf]
    %v1311 = vld [vmem:[#allocation5 + $0x734] sm:$0xf]
    %v1312 = vld [vmem:[#allocation5 + $0x738] sm:$0xf]
    %v1313 = vld [vmem:[#allocation5 + $0x73c] sm:$0xf]
    %v1314 = vld [vmem:[#allocation5 + $0x740] sm:$0xf]
    %v1315 = vld [vmem:[#allocation5 + $0x744] sm:$0xf]
    %v1316 = vld [vmem:[#allocation5 + $0x748] sm:$0xf]
    %v1317 = vld [vmem:[#allocation5 + $0x74c] sm:$0xf]
    %v1318 = vld [vmem:[#allocation5 + $0x750] sm:$0xf]
    %v1319 = vld [vmem:[#allocation5 + $0x754] sm:$0xf]
    %v1320 = vld [vmem:[#allocation5 + $0x758] sm:$0xf]
    %v1321 = vld [vmem:[#allocation5 + $0x75c] sm:$0xf]
    %v1322 = vld [vmem:[#allocation5 + $0x760] sm:$0xf]
    %v1323 = vld [vmem:[#allocation5 + $0x764] sm:$0xf]
    %v1324 = vld [vmem:[#allocation5 + $0x768] sm:$0xf]
    %v1325 = vld [vmem:[#allocation5 + $0x76c] sm:$0xf]
    %v1326 = vld [vmem:[#allocation5 + $0x770] sm:$0xf]
    %v1327 = vld [vmem:[#allocation5 + $0x774] sm:$0xf]
    %v1328 = vld [vmem:[#allocation5 + $0x778] sm:$0xf]
    %v1329 = vld [vmem:[#allocation5 + $0x77c] sm:$0xf]
    %v1330 = vld [vmem:[#allocation5 + $0x780] sm:$0xf]
    %v1331 = vld [vmem:[#allocation5 + $0x784] sm:$0xf]
    %v1332 = vld [vmem:[#allocation5 + $0x788] sm:$0xf]
    %v1333 = vld [vmem:[#allocation5 + $0x78c] sm:$0xf]
    %v1334 = vld [vmem:[#allocation5 + $0x790] sm:$0xf]
    %v1335 = vld [vmem:[#allocation5 + $0x794] sm:$0xf]
    %v1336 = vld [vmem:[#allocation5 + $0x798] sm:$0xf]
    %v1337 = vld [vmem:[#allocation5 + $0x79c] sm:$0xf]
    %v1338 = vld [vmem:[#allocation5 + $0x7a0] sm:$0xf]
    %v1339 = vld [vmem:[#allocation5 + $0x7a4] sm:$0xf]
    %v1340 = vld [vmem:[#allocation5 + $0x7a8] sm:$0xf]
    %v1341 = vld [vmem:[#allocation5 + $0x7ac] sm:$0xf]
    %v1342 = vld [vmem:[#allocation5 + $0x7b0] sm:$0xf]
    %v1343 = vld [vmem:[#allocation5 + $0x7b4] sm:$0xf]
    %v1344 = vld [vmem:[#allocation5 + $0x7b8] sm:$0xf]
    %v1345 = vld [vmem:[#allocation5 + $0x7bc] sm:$0xf]
    %v1346 = vld [vmem:[#allocation5 + $0x7c0] sm:$0xf]
    %v1347 = vld [vmem:[#allocation5 + $0x7c4] sm:$0xf]
    %v1348 = vld [vmem:[#allocation5 + $0x7c8] sm:$0xf]
    %v1349 = vld [vmem:[#allocation5 + $0x7cc] sm:$0xf]
    %v1350 = vld [vmem:[#allocation5 + $0x7d0] sm:$0xf]
    %v1351 = vld [vmem:[#allocation5 + $0x7d4] sm:$0xf]
    %v1352 = vld [vmem:[#allocation5 + $0x7d8] sm:$0xf]
    %v1353 = vld [vmem:[#allocation5 + $0x7dc] sm:$0xf]
    %v1354 = vld [vmem:[#allocation5 + $0x7e0] sm:$0xf]
    %v1355 = vld [vmem:[#allocation5 + $0x7e4] sm:$0xf]
    %v1356 = vld [vmem:[#allocation5 + $0x7e8] sm:$0xf]
    %v1357 = vld [vmem:[#allocation5 + $0x7ec] sm:$0xf]
    %v1358 = vld [vmem:[#allocation5 + $0x7f0] sm:$0xf]
    %v1359 = vld [vmem:[#allocation5 + $0x7f4] sm:$0xf]
    %v1360 = vld [vmem:[#allocation5 + $0x7f8] sm:$0xf]
    %v1361 = vld [vmem:[#allocation5 + $0x7fc] sm:$0xf]
    %v1362 = vld [vmem:[%s2] sm:$0x1]
    %v1364 = vlaneseq
    %v1365 = vshrl.u32 %v1364, 7
    %v1366 = vsub.s32 0, %v1365
    %v1367 = vrot.slane %v1362, %v1366
    %v1881 = vunpack.c.l.b16 %v850
    %v1882 = vunpack.c.l.b16 %v851
    %v1883 = vunpack.c.l.b16 %v852
    %v1884 = vunpack.c.l.b16 %v853
    %v1885 = vunpack.c.l.b16 %v854
    %v1886 = vunpack.c.l.b16 %v855
    %v1887 = vunpack.c.l.b16 %v856
    %v1888 = vunpack.c.l.b16 %v857
    %v1889 = vunpack.c.l.b16 %v858
    %v1890 = vunpack.c.l.b16 %v859
    %v1891 = vunpack.c.l.b16 %v860
    %v1892 = vunpack.c.l.b16 %v861
    %v1893 = vunpack.c.l.b16 %v862
    %v1894 = vunpack.c.l.b16 %v863
    %v1895 = vunpack.c.l.b16 %v864
    %v1896 = vunpack.c.l.b16 %v865
    %v1897 = vunpack.c.l.b16 %v866
    %v1898 = vunpack.c.l.b16 %v867
    %v1899 = vunpack.c.l.b16 %v868
    %v1900 = vunpack.c.l.b16 %v869
    %v1901 = vunpack.c.l.b16 %v870
    %v1902 = vunpack.c.l.b16 %v871
    %v1903 = vunpack.c.l.b16 %v872
    %v1904 = vunpack.c.l.b16 %v873
    %v1905 = vunpack.c.l.b16 %v874
    %v1906 = vunpack.c.l.b16 %v875
    %v1907 = vunpack.c.l.b16 %v876
    %v1908 = vunpack.c.l.b16 %v877
    %v1909 = vunpack.c.l.b16 %v878
    %v1910 = vunpack.c.l.b16 %v879
    %v1911 = vunpack.c.l.b16 %v880
    %v1912 = vunpack.c.l.b16 %v881
    %v1913 = vunpack.c.l.b16 %v882
    %v1914 = vunpack.c.l.b16 %v883
    %v1915 = vunpack.c.l.b16 %v884
    %v1916 = vunpack.c.l.b16 %v885
    %v1917 = vunpack.c.l.b16 %v886
    %v1918 = vunpack.c.l.b16 %v887
    %v1919 = vunpack.c.l.b16 %v888
    %v1920 = vunpack.c.l.b16 %v889
    %v1921 = vunpack.c.l.b16 %v890
    %v1922 = vunpack.c.l.b16 %v891
    %v1923 = vunpack.c.l.b16 %v892
    %v1924 = vunpack.c.l.b16 %v893
    %v1925 = vunpack.c.l.b16 %v894
    %v1926 = vunpack.c.l.b16 %v895
    %v1927 = vunpack.c.l.b16 %v896
    %v1928 = vunpack.c.l.b16 %v897
    %v1929 = vunpack.c.l.b16 %v898
    %v1930 = vunpack.c.l.b16 %v899
    %v1931 = vunpack.c.l.b16 %v900
    %v1932 = vunpack.c.l.b16 %v901
    %v1933 = vunpack.c.l.b16 %v902
    %v1934 = vunpack.c.l.b16 %v903
    %v1935 = vunpack.c.l.b16 %v904
    %v1936 = vunpack.c.l.b16 %v905
    %v1937 = vunpack.c.l.b16 %v906
    %v1938 = vunpack.c.l.b16 %v907
    %v1939 = vunpack.c.l.b16 %v908
    %v1940 = vunpack.c.l.b16 %v909
    %v1941 = vunpack.c.l.b16 %v910
    %v1942 = vunpack.c.l.b16 %v911
    %v1943 = vunpack.c.l.b16 %v912
    %v1944 = vunpack.c.l.b16 %v913
    %v1945 = vunpack.c.l.b16 %v914
    %v1946 = vunpack.c.l.b16 %v915
    %v1947 = vunpack.c.l.b16 %v916
    %v1948 = vunpack.c.l.b16 %v917
    %v1949 = vunpack.c.l.b16 %v918
    %v1950 = vunpack.c.l.b16 %v919
    %v1951 = vunpack.c.l.b16 %v920
    %v1952 = vunpack.c.l.b16 %v921
    %v1953 = vunpack.c.l.b16 %v922
    %v1954 = vunpack.c.l.b16 %v923
    %v1955 = vunpack.c.l.b16 %v924
    %v1956 = vunpack.c.l.b16 %v925
    %v1957 = vunpack.c.l.b16 %v926
    %v1958 = vunpack.c.l.b16 %v927
    %v1959 = vunpack.c.l.b16 %v928
    %v1960 = vunpack.c.l.b16 %v929
    %v1961 = vunpack.c.l.b16 %v930
    %v1962 = vunpack.c.l.b16 %v931
    %v1963 = vunpack.c.l.b16 %v932
    %v1964 = vunpack.c.l.b16 %v933
    %v1965 = vunpack.c.l.b16 %v934
    %v1966 = vunpack.c.l.b16 %v935
    %v1967 = vunpack.c.l.b16 %v936
    %v1968 = vunpack.c.l.b16 %v937
    %v1969 = vunpack.c.l.b16 %v938
    %v1970 = vunpack.c.l.b16 %v939
    %v1971 = vunpack.c.l.b16 %v940
    %v1972 = vunpack.c.l.b16 %v941
    %v1973 = vunpack.c.l.b16 %v942
    %v1974 = vunpack.c.l.b16 %v943
    %v1975 = vunpack.c.l.b16 %v944
    %v1976 = vunpack.c.l.b16 %v945
    %v1977 = vunpack.c.l.b16 %v946
    %v1978 = vunpack.c.l.b16 %v947
    %v1979 = vunpack.c.l.b16 %v948
    %v1980 = vunpack.c.l.b16 %v949
    %v1981 = vunpack.c.l.b16 %v950
    %v1982 = vunpack.c.l.b16 %v951
    %v1983 = vunpack.c.l.b16 %v952
    %v1984 = vunpack.c.l.b16 %v953
    %v1985 = vunpack.c.l.b16 %v954
    %v1986 = vunpack.c.l.b16 %v955
    %v1987 = vunpack.c.l.b16 %v956
    %v1988 = vunpack.c.l.b16 %v957
    %v1989 = vunpack.c.l.b16 %v958
    %v1990 = vunpack.c.l.b16 %v959
    %v1991 = vunpack.c.l.b16 %v960
    %v1992 = vunpack.c.l.b16 %v961
    %v1993 = vunpack.c.l.b16 %v962
    %v1994 = vunpack.c.l.b16 %v963
    %v1995 = vunpack.c.l.b16 %v964
    %v1996 = vunpack.c.l.b16 %v965
    %v1997 = vunpack.c.l.b16 %v966
    %v1998 = vunpack.c.l.b16 %v967
    %v1999 = vunpack.c.l.b16 %v968
    %v2000 = vunpack.c.l.b16 %v969
    %v2001 = vunpack.c.l.b16 %v970
    %v2002 = vunpack.c.l.b16 %v971
    %v2003 = vunpack.c.l.b16 %v972
    %v2004 = vunpack.c.l.b16 %v973
    %v2005 = vunpack.c.l.b16 %v974
    %v2006 = vunpack.c.l.b16 %v975
    %v2007 = vunpack.c.l.b16 %v976
    %v2008 = vunpack.c.l.b16 %v977
    %v2009 = vunpack.c.l.b16 %v978
    %v2010 = vunpack.c.l.b16 %v979
    %v2011 = vunpack.c.l.b16 %v980
    %v2012 = vunpack.c.l.b16 %v981
    %v2013 = vunpack.c.l.b16 %v982
    %v2014 = vunpack.c.l.b16 %v983
    %v2015 = vunpack.c.l.b16 %v984
    %v2016 = vunpack.c.l.b16 %v985
    %v2017 = vunpack.c.l.b16 %v986
    %v2018 = vunpack.c.l.b16 %v987
    %v2019 = vunpack.c.l.b16 %v988
    %v2020 = vunpack.c.l.b16 %v989
    %v2021 = vunpack.c.l.b16 %v990
    %v2022 = vunpack.c.l.b16 %v991
    %v2023 = vunpack.c.l.b16 %v992
    %v2024 = vunpack.c.l.b16 %v993
    %v2025 = vunpack.c.l.b16 %v994
    %v2026 = vunpack.c.l.b16 %v995
    %v2027 = vunpack.c.l.b16 %v996
    %v2028 = vunpack.c.l.b16 %v997
    %v2029 = vunpack.c.l.b16 %v998
    %v2030 = vunpack.c.l.b16 %v999
    %v2031 = vunpack.c.l.b16 %v1000
    %v2032 = vunpack.c.l.b16 %v1001
    %v2033 = vunpack.c.l.b16 %v1002
    %v2034 = vunpack.c.l.b16 %v1003
    %v2035 = vunpack.c.l.b16 %v1004
    %v2036 = vunpack.c.l.b16 %v1005
    %v2037 = vunpack.c.l.b16 %v1006
    %v2038 = vunpack.c.l.b16 %v1007
    %v2039 = vunpack.c.l.b16 %v1008
    %v2040 = vunpack.c.l.b16 %v1009
    %v2041 = vunpack.c.l.b16 %v1010
    %v2042 = vunpack.c.l.b16 %v1011
    %v2043 = vunpack.c.l.b16 %v1012
    %v2044 = vunpack.c.l.b16 %v1013
    %v2045 = vunpack.c.l.b16 %v1014
    %v2046 = vunpack.c.l.b16 %v1015
    %v2047 = vunpack.c.l.b16 %v1016
    %v2048 = vunpack.c.l.b16 %v1017
    %v2049 = vunpack.c.l.b16 %v1018
    %v2050 = vunpack.c.l.b16 %v1019
    %v2051 = vunpack.c.l.b16 %v1020
    %v2052 = vunpack.c.l.b16 %v1021
    %v2053 = vunpack.c.l.b16 %v1022
    %v2054 = vunpack.c.l.b16 %v1023
    %v2055 = vunpack.c.l.b16 %v1024
    %v2056 = vunpack.c.l.b16 %v1025
    %v2057 = vunpack.c.l.b16 %v1026
    %v2058 = vunpack.c.l.b16 %v1027
    %v2059 = vunpack.c.l.b16 %v1028
    %v2060 = vunpack.c.l.b16 %v1029
    %v2061 = vunpack.c.l.b16 %v1030
    %v2062 = vunpack.c.l.b16 %v1031
    %v2063 = vunpack.c.l.b16 %v1032
    %v2064 = vunpack.c.l.b16 %v1033
    %v2065 = vunpack.c.l.b16 %v1034
    %v2066 = vunpack.c.l.b16 %v1035
    %v2067 = vunpack.c.l.b16 %v1036
    %v2068 = vunpack.c.l.b16 %v1037
    %v2069 = vunpack.c.l.b16 %v1038
    %v2070 = vunpack.c.l.b16 %v1039
    %v2071 = vunpack.c.l.b16 %v1040
    %v2072 = vunpack.c.l.b16 %v1041
    %v2073 = vunpack.c.l.b16 %v1042
    %v2074 = vunpack.c.l.b16 %v1043
    %v2075 = vunpack.c.l.b16 %v1044
    %v2076 = vunpack.c.l.b16 %v1045
    %v2077 = vunpack.c.l.b16 %v1046
    %v2078 = vunpack.c.l.b16 %v1047
    %v2079 = vunpack.c.l.b16 %v1048
    %v2080 = vunpack.c.l.b16 %v1049
    %v2081 = vunpack.c.l.b16 %v1050
    %v2082 = vunpack.c.l.b16 %v1051
    %v2083 = vunpack.c.l.b16 %v1052
    %v2084 = vunpack.c.l.b16 %v1053
    %v2085 = vunpack.c.l.b16 %v1054
    %v2086 = vunpack.c.l.b16 %v1055
    %v2087 = vunpack.c.l.b16 %v1056
    %v2088 = vunpack.c.l.b16 %v1057
    %v2089 = vunpack.c.l.b16 %v1058
    %v2090 = vunpack.c.l.b16 %v1059
    %v2091 = vunpack.c.l.b16 %v1060
    %v2092 = vunpack.c.l.b16 %v1061
    %v2093 = vunpack.c.l.b16 %v1062
    %v2094 = vunpack.c.l.b16 %v1063
    %v2095 = vunpack.c.l.b16 %v1064
    %v2096 = vunpack.c.l.b16 %v1065
    %v2097 = vunpack.c.l.b16 %v1066
    %v2098 = vunpack.c.l.b16 %v1067
    %v2099 = vunpack.c.l.b16 %v1068
    %v2100 = vunpack.c.l.b16 %v1069
    %v2101 = vunpack.c.l.b16 %v1070
    %v2102 = vunpack.c.l.b16 %v1071
    %v2103 = vunpack.c.l.b16 %v1072
    %v2104 = vunpack.c.l.b16 %v1073
    %v2105 = vunpack.c.l.b16 %v1074
    %v2106 = vunpack.c.l.b16 %v1075
    %v2107 = vunpack.c.l.b16 %v1076
    %v2108 = vunpack.c.l.b16 %v1077
    %v2109 = vunpack.c.l.b16 %v1078
    %v2110 = vunpack.c.l.b16 %v1079
    %v2111 = vunpack.c.l.b16 %v1080
    %v2112 = vunpack.c.l.b16 %v1081
    %v2113 = vunpack.c.l.b16 %v1082
    %v2114 = vunpack.c.l.b16 %v1083
    %v2115 = vunpack.c.l.b16 %v1084
    %v2116 = vunpack.c.l.b16 %v1085
    %v2117 = vunpack.c.l.b16 %v1086
    %v2118 = vunpack.c.l.b16 %v1087
    %v2119 = vunpack.c.l.b16 %v1088
    %v2120 = vunpack.c.l.b16 %v1089
    %v2121 = vunpack.c.l.b16 %v1090
    %v2122 = vunpack.c.l.b16 %v1091
    %v2123 = vunpack.c.l.b16 %v1092
    %v2124 = vunpack.c.l.b16 %v1093
    %v2125 = vunpack.c.l.b16 %v1094
    %v2126 = vunpack.c.l.b16 %v1095
    %v2127 = vunpack.c.l.b16 %v1096
    %v2128 = vunpack.c.l.b16 %v1097
    %v2129 = vunpack.c.l.b16 %v1098
    %v2130 = vunpack.c.l.b16 %v1099
    %v2131 = vunpack.c.l.b16 %v1100
    %v2132 = vunpack.c.l.b16 %v1101
    %v2133 = vunpack.c.l.b16 %v1102
    %v2134 = vunpack.c.l.b16 %v1103
    %v2135 = vunpack.c.l.b16 %v1104
    %v2136 = vunpack.c.l.b16 %v1105
    %v2137 = vunpack.c.l.b16 %v1106
    %v2138 = vunpack.c.l.b16 %v1107
    %v2139 = vunpack.c.l.b16 %v1108
    %v2140 = vunpack.c.l.b16 %v1109
    %v2141 = vunpack.c.l.b16 %v1110
    %v2142 = vunpack.c.l.b16 %v1111
    %v2143 = vunpack.c.l.b16 %v1112
    %v2144 = vunpack.c.l.b16 %v1113
    %v2145 = vunpack.c.l.b16 %v1114
    %v2146 = vunpack.c.l.b16 %v1115
    %v2147 = vunpack.c.l.b16 %v1116
    %v2148 = vunpack.c.l.b16 %v1117
    %v2149 = vunpack.c.l.b16 %v1118
    %v2150 = vunpack.c.l.b16 %v1119
    %v2151 = vunpack.c.l.b16 %v1120
    %v2152 = vunpack.c.l.b16 %v1121
    %v2153 = vunpack.c.l.b16 %v1122
    %v2154 = vunpack.c.l.b16 %v1123
    %v2155 = vunpack.c.l.b16 %v1124
    %v2156 = vunpack.c.l.b16 %v1125
    %v2157 = vunpack.c.l.b16 %v1126
    %v2158 = vunpack.c.l.b16 %v1127
    %v2159 = vunpack.c.l.b16 %v1128
    %v2160 = vunpack.c.l.b16 %v1129
    %v2161 = vunpack.c.l.b16 %v1130
    %v2162 = vunpack.c.l.b16 %v1131
    %v2163 = vunpack.c.l.b16 %v1132
    %v2164 = vunpack.c.l.b16 %v1133
    %v2165 = vunpack.c.l.b16 %v1134
    %v2166 = vunpack.c.l.b16 %v1135
    %v2167 = vunpack.c.l.b16 %v1136
    %v2168 = vunpack.c.l.b16 %v1137
    %v2169 = vunpack.c.l.b16 %v1138
    %v2170 = vunpack.c.l.b16 %v1139
    %v2171 = vunpack.c.l.b16 %v1140
    %v2172 = vunpack.c.l.b16 %v1141
    %v2173 = vunpack.c.l.b16 %v1142
    %v2174 = vunpack.c.l.b16 %v1143
    %v2175 = vunpack.c.l.b16 %v1144
    %v2176 = vunpack.c.l.b16 %v1145
    %v2177 = vunpack.c.l.b16 %v1146
    %v2178 = vunpack.c.l.b16 %v1147
    %v2179 = vunpack.c.l.b16 %v1148
    %v2180 = vunpack.c.l.b16 %v1149
    %v2181 = vunpack.c.l.b16 %v1150
    %v2182 = vunpack.c.l.b16 %v1151
    %v2183 = vunpack.c.l.b16 %v1152
    %v2184 = vunpack.c.l.b16 %v1153
    %v2185 = vunpack.c.l.b16 %v1154
    %v2186 = vunpack.c.l.b16 %v1155
    %v2187 = vunpack.c.l.b16 %v1156
    %v2188 = vunpack.c.l.b16 %v1157
    %v2189 = vunpack.c.l.b16 %v1158
    %v2190 = vunpack.c.l.b16 %v1159
    %v2191 = vunpack.c.l.b16 %v1160
    %v2192 = vunpack.c.l.b16 %v1161
    %v2193 = vunpack.c.l.b16 %v1162
    %v2194 = vunpack.c.l.b16 %v1163
    %v2195 = vunpack.c.l.b16 %v1164
    %v2196 = vunpack.c.l.b16 %v1165
    %v2197 = vunpack.c.l.b16 %v1166
    %v2198 = vunpack.c.l.b16 %v1167
    %v2199 = vunpack.c.l.b16 %v1168
    %v2200 = vunpack.c.l.b16 %v1169
    %v2201 = vunpack.c.l.b16 %v1170
    %v2202 = vunpack.c.l.b16 %v1171
    %v2203 = vunpack.c.l.b16 %v1172
    %v2204 = vunpack.c.l.b16 %v1173
    %v2205 = vunpack.c.l.b16 %v1174
    %v2206 = vunpack.c.l.b16 %v1175
    %v2207 = vunpack.c.l.b16 %v1176
    %v2208 = vunpack.c.l.b16 %v1177
    %v2209 = vunpack.c.l.b16 %v1178
    %v2210 = vunpack.c.l.b16 %v1179
    %v2211 = vunpack.c.l.b16 %v1180
    %v2212 = vunpack.c.l.b16 %v1181
    %v2213 = vunpack.c.l.b16 %v1182
    %v2214 = vunpack.c.l.b16 %v1183
    %v2215 = vunpack.c.l.b16 %v1184
    %v2216 = vunpack.c.l.b16 %v1185
    %v2217 = vunpack.c.l.b16 %v1186
    %v2218 = vunpack.c.l.b16 %v1187
    %v2219 = vunpack.c.l.b16 %v1188
    %v2220 = vunpack.c.l.b16 %v1189
    %v2221 = vunpack.c.l.b16 %v1190
    %v2222 = vunpack.c.l.b16 %v1191
    %v2223 = vunpack.c.l.b16 %v1192
    %v2224 = vunpack.c.l.b16 %v1193
    %v2225 = vunpack.c.l.b16 %v1194
    %v2226 = vunpack.c.l.b16 %v1195
    %v2227 = vunpack.c.l.b16 %v1196
    %v2228 = vunpack.c.l.b16 %v1197
    %v2229 = vunpack.c.l.b16 %v1198
    %v2230 = vunpack.c.l.b16 %v1199
    %v2231 = vunpack.c.l.b16 %v1200
    %v2232 = vunpack.c.l.b16 %v1201
    %v2233 = vunpack.c.l.b16 %v1202
    %v2234 = vunpack.c.l.b16 %v1203
    %v2235 = vunpack.c.l.b16 %v1204
    %v2236 = vunpack.c.l.b16 %v1205
    %v2237 = vunpack.c.l.b16 %v1206
    %v2238 = vunpack.c.l.b16 %v1207
    %v2239 = vunpack.c.l.b16 %v1208
    %v2240 = vunpack.c.l.b16 %v1209
    %v2241 = vunpack.c.l.b16 %v1210
    %v2242 = vunpack.c.l.b16 %v1211
    %v2243 = vunpack.c.l.b16 %v1212
    %v2244 = vunpack.c.l.b16 %v1213
    %v2245 = vunpack.c.l.b16 %v1214
    %v2246 = vunpack.c.l.b16 %v1215
    %v2247 = vunpack.c.l.b16 %v1216
    %v2248 = vunpack.c.l.b16 %v1217
    %v2249 = vunpack.c.l.b16 %v1218
    %v2250 = vunpack.c.l.b16 %v1219
    %v2251 = vunpack.c.l.b16 %v1220
    %v2252 = vunpack.c.l.b16 %v1221
    %v2253 = vunpack.c.l.b16 %v1222
    %v2254 = vunpack.c.l.b16 %v1223
    %v2255 = vunpack.c.l.b16 %v1224
    %v2256 = vunpack.c.l.b16 %v1225
    %v2257 = vunpack.c.l.b16 %v1226
    %v2258 = vunpack.c.l.b16 %v1227
    %v2259 = vunpack.c.l.b16 %v1228
    %v2260 = vunpack.c.l.b16 %v1229
    %v2261 = vunpack.c.l.b16 %v1230
    %v2262 = vunpack.c.l.b16 %v1231
    %v2263 = vunpack.c.l.b16 %v1232
    %v2264 = vunpack.c.l.b16 %v1233
    %v2265 = vunpack.c.l.b16 %v1234
    %v2266 = vunpack.c.l.b16 %v1235
    %v2267 = vunpack.c.l.b16 %v1236
    %v2268 = vunpack.c.l.b16 %v1237
    %v2269 = vunpack.c.l.b16 %v1238
    %v2270 = vunpack.c.l.b16 %v1239
    %v2271 = vunpack.c.l.b16 %v1240
    %v2272 = vunpack.c.l.b16 %v1241
    %v2273 = vunpack.c.l.b16 %v1242
    %v2274 = vunpack.c.l.b16 %v1243
    %v2275 = vunpack.c.l.b16 %v1244
    %v2276 = vunpack.c.l.b16 %v1245
    %v2277 = vunpack.c.l.b16 %v1246
    %v2278 = vunpack.c.l.b16 %v1247
    %v2279 = vunpack.c.l.b16 %v1248
    %v2280 = vunpack.c.l.b16 %v1249
    %v2281 = vunpack.c.l.b16 %v1250
    %v2282 = vunpack.c.l.b16 %v1251
    %v2283 = vunpack.c.l.b16 %v1252
    %v2284 = vunpack.c.l.b16 %v1253
    %v2285 = vunpack.c.l.b16 %v1254
    %v2286 = vunpack.c.l.b16 %v1255
    %v2287 = vunpack.c.l.b16 %v1256
    %v2288 = vunpack.c.l.b16 %v1257
    %v2289 = vunpack.c.l.b16 %v1258
    %v2290 = vunpack.c.l.b16 %v1259
    %v2291 = vunpack.c.l.b16 %v1260
    %v2292 = vunpack.c.l.b16 %v1261
    %v2293 = vunpack.c.l.b16 %v1262
    %v2294 = vunpack.c.l.b16 %v1263
    %v2295 = vunpack.c.l.b16 %v1264
    %v2296 = vunpack.c.l.b16 %v1265
    %v2297 = vunpack.c.l.b16 %v1266
    %v2298 = vunpack.c.l.b16 %v1267
    %v2299 = vunpack.c.l.b16 %v1268
    %v2300 = vunpack.c.l.b16 %v1269
    %v2301 = vunpack.c.l.b16 %v1270
    %v2302 = vunpack.c.l.b16 %v1271
    %v2303 = vunpack.c.l.b16 %v1272
    %v2304 = vunpack.c.l.b16 %v1273
    %v2305 = vunpack.c.l.b16 %v1274
    %v2306 = vunpack.c.l.b16 %v1275
    %v2307 = vunpack.c.l.b16 %v1276
    %v2308 = vunpack.c.l.b16 %v1277
    %v2309 = vunpack.c.l.b16 %v1278
    %v2310 = vunpack.c.l.b16 %v1279
    %v2311 = vunpack.c.l.b16 %v1280
    %v2312 = vunpack.c.l.b16 %v1281
    %v2313 = vunpack.c.l.b16 %v1282
    %v2314 = vunpack.c.l.b16 %v1283
    %v2315 = vunpack.c.l.b16 %v1284
    %v2316 = vunpack.c.l.b16 %v1285
    %v2317 = vunpack.c.l.b16 %v1286
    %v2318 = vunpack.c.l.b16 %v1287
    %v2319 = vunpack.c.l.b16 %v1288
    %v2320 = vunpack.c.l.b16 %v1289
    %v2321 = vunpack.c.l.b16 %v1290
    %v2322 = vunpack.c.l.b16 %v1291
    %v2323 = vunpack.c.l.b16 %v1292
    %v2324 = vunpack.c.l.b16 %v1293
    %v2325 = vunpack.c.l.b16 %v1294
    %v2326 = vunpack.c.l.b16 %v1295
    %v2327 = vunpack.c.l.b16 %v1296
    %v2328 = vunpack.c.l.b16 %v1297
    %v2329 = vunpack.c.l.b16 %v1298
    %v2330 = vunpack.c.l.b16 %v1299
    %v2331 = vunpack.c.l.b16 %v1300
    %v2332 = vunpack.c.l.b16 %v1301
    %v2333 = vunpack.c.l.b16 %v1302
    %v2334 = vunpack.c.l.b16 %v1303
    %v2335 = vunpack.c.l.b16 %v1304
    %v2336 = vunpack.c.l.b16 %v1305
    %v2337 = vunpack.c.l.b16 %v1306
    %v2338 = vunpack.c.l.b16 %v1307
    %v2339 = vunpack.c.l.b16 %v1308
    %v2340 = vunpack.c.l.b16 %v1309
    %v2341 = vunpack.c.l.b16 %v1310
    %v2342 = vunpack.c.l.b16 %v1311
    %v2343 = vunpack.c.l.b16 %v1312
    %v2344 = vunpack.c.l.b16 %v1313
    %v2345 = vunpack.c.l.b16 %v1314
    %v2346 = vunpack.c.l.b16 %v1315
    %v2347 = vunpack.c.l.b16 %v1316
    %v2348 = vunpack.c.l.b16 %v1317
    %v2349 = vunpack.c.l.b16 %v1318
    %v2350 = vunpack.c.l.b16 %v1319
    %v2351 = vunpack.c.l.b16 %v1320
    %v2352 = vunpack.c.l.b16 %v1321
    %v2353 = vunpack.c.l.b16 %v1322
    %v2354 = vunpack.c.l.b16 %v1323
    %v2355 = vunpack.c.l.b16 %v1324
    %v2356 = vunpack.c.l.b16 %v1325
    %v2357 = vunpack.c.l.b16 %v1326
    %v2358 = vunpack.c.l.b16 %v1327
    %v2359 = vunpack.c.l.b16 %v1328
    %v2360 = vunpack.c.l.b16 %v1329
    %v2361 = vunpack.c.l.b16 %v1330
    %v2362 = vunpack.c.l.b16 %v1331
    %v2363 = vunpack.c.l.b16 %v1332
    %v2364 = vunpack.c.l.b16 %v1333
    %v2365 = vunpack.c.l.b16 %v1334
    %v2366 = vunpack.c.l.b16 %v1335
    %v2367 = vunpack.c.l.b16 %v1336
    %v2368 = vunpack.c.l.b16 %v1337
    %v2369 = vunpack.c.l.b16 %v1338
    %v2370 = vunpack.c.l.b16 %v1339
    %v2371 = vunpack.c.l.b16 %v1340
    %v2372 = vunpack.c.l.b16 %v1341
    %v2373 = vunpack.c.l.b16 %v1342
    %v2374 = vunpack.c.l.b16 %v1343
    %v2375 = vunpack.c.l.b16 %v1344
    %v2376 = vunpack.c.l.b16 %v1345
    %v2377 = vunpack.c.l.b16 %v1346
    %v2378 = vunpack.c.l.b16 %v1347
    %v2379 = vunpack.c.l.b16 %v1348
    %v2380 = vunpack.c.l.b16 %v1349
    %v2381 = vunpack.c.l.b16 %v1350
    %v2382 = vunpack.c.l.b16 %v1351
    %v2383 = vunpack.c.l.b16 %v1352
    %v2384 = vunpack.c.l.b16 %v1353
    %v2385 = vunpack.c.l.b16 %v1354
    %v2386 = vunpack.c.l.b16 %v1355
    %v2387 = vunpack.c.l.b16 %v1356
    %v2388 = vunpack.c.l.b16 %v1357
    %v2389 = vunpack.c.l.b16 %v1358
    %v2390 = vunpack.c.l.b16 %v1359
    %v2391 = vunpack.c.l.b16 %v1360
    %v2392 = vunpack.c.l.b16 %v1361
    %v2393 = vpack.c.b16 %v1882, %v1881
    %v2394 = vpack.c.b16 %v1884, %v1883
    %v2395 = vpack.c.b16 %v1886, %v1885
    %v2396 = vpack.c.b16 %v1888, %v1887
    %v2397 = vpack.c.b16 %v1890, %v1889
    %v2398 = vpack.c.b16 %v1892, %v1891
    %v2399 = vpack.c.b16 %v1894, %v1893
    %v2400 = vpack.c.b16 %v1896, %v1895
    %v2401 = vpack.c.b16 %v1898, %v1897
    %v2402 = vpack.c.b16 %v1900, %v1899
    %v2403 = vpack.c.b16 %v1902, %v1901
    %v2404 = vpack.c.b16 %v1904, %v1903
    %v2405 = vpack.c.b16 %v1906, %v1905
    %v2406 = vpack.c.b16 %v1908, %v1907
    %v2407 = vpack.c.b16 %v1910, %v1909
    %v2408 = vpack.c.b16 %v1912, %v1911
    %v2409 = vpack.c.b16 %v1914, %v1913
    %v2410 = vpack.c.b16 %v1916, %v1915
    %v2411 = vpack.c.b16 %v1918, %v1917
    %v2412 = vpack.c.b16 %v1920, %v1919
    %v2413 = vpack.c.b16 %v1922, %v1921
    %v2414 = vpack.c.b16 %v1924, %v1923
    %v2415 = vpack.c.b16 %v1926, %v1925
    %v2416 = vpack.c.b16 %v1928, %v1927
    %v2417 = vpack.c.b16 %v1930, %v1929
    %v2418 = vpack.c.b16 %v1932, %v1931
    %v2419 = vpack.c.b16 %v1934, %v1933
    %v2420 = vpack.c.b16 %v1936, %v1935
    %v2421 = vpack.c.b16 %v1938, %v1937
    %v2422 = vpack.c.b16 %v1940, %v1939
    %v2423 = vpack.c.b16 %v1942, %v1941
    %v2424 = vpack.c.b16 %v1944, %v1943
    %v2425 = vpack.c.b16 %v1946, %v1945
    %v2426 = vpack.c.b16 %v1948, %v1947
    %v2427 = vpack.c.b16 %v1950, %v1949
    %v2428 = vpack.c.b16 %v1952, %v1951
    %v2429 = vpack.c.b16 %v1954, %v1953
    %v2430 = vpack.c.b16 %v1956, %v1955
    %v2431 = vpack.c.b16 %v1958, %v1957
    %v2432 = vpack.c.b16 %v1960, %v1959
    %v2433 = vpack.c.b16 %v1962, %v1961
    %v2434 = vpack.c.b16 %v1964, %v1963
    %v2435 = vpack.c.b16 %v1966, %v1965
    %v2436 = vpack.c.b16 %v1968, %v1967
    %v2437 = vpack.c.b16 %v1970, %v1969
    %v2438 = vpack.c.b16 %v1972, %v1971
    %v2439 = vpack.c.b16 %v1974, %v1973
    %v2440 = vpack.c.b16 %v1976, %v1975
    %v2441 = vpack.c.b16 %v1978, %v1977
    %v2442 = vpack.c.b16 %v1980, %v1979
    %v2443 = vpack.c.b16 %v1982, %v1981
    %v2444 = vpack.c.b16 %v1984, %v1983
    %v2445 = vpack.c.b16 %v1986, %v1985
    %v2446 = vpack.c.b16 %v1988, %v1987
    %v2447 = vpack.c.b16 %v1990, %v1989
    %v2448 = vpack.c.b16 %v1992, %v1991
    %v2449 = vpack.c.b16 %v1994, %v1993
    %v2450 = vpack.c.b16 %v1996, %v1995
    %v2451 = vpack.c.b16 %v1998, %v1997
    %v2452 = vpack.c.b16 %v2000, %v1999
    %v2453 = vpack.c.b16 %v2002, %v2001
    %v2454 = vpack.c.b16 %v2004, %v2003
    %v2455 = vpack.c.b16 %v2006, %v2005
    %v2456 = vpack.c.b16 %v2008, %v2007
    %v2457 = vpack.c.b16 %v2010, %v2009
    %v2458 = vpack.c.b16 %v2012, %v2011
    %v2459 = vpack.c.b16 %v2014, %v2013
    %v2460 = vpack.c.b16 %v2016, %v2015
    %v2461 = vpack.c.b16 %v2018, %v2017
    %v2462 = vpack.c.b16 %v2020, %v2019
    %v2463 = vpack.c.b16 %v2022, %v2021
    %v2464 = vpack.c.b16 %v2024, %v2023
    %v2465 = vpack.c.b16 %v2026, %v2025
    %v2466 = vpack.c.b16 %v2028, %v2027
    %v2467 = vpack.c.b16 %v2030, %v2029
    %v2468 = vpack.c.b16 %v2032, %v2031
    %v2469 = vpack.c.b16 %v2034, %v2033
    %v2470 = vpack.c.b16 %v2036, %v2035
    %v2471 = vpack.c.b16 %v2038, %v2037
    %v2472 = vpack.c.b16 %v2040, %v2039
    %v2473 = vpack.c.b16 %v2042, %v2041
    %v2474 = vpack.c.b16 %v2044, %v2043
    %v2475 = vpack.c.b16 %v2046, %v2045
    %v2476 = vpack.c.b16 %v2048, %v2047
    %v2477 = vpack.c.b16 %v2050, %v2049
    %v2478 = vpack.c.b16 %v2052, %v2051
    %v2479 = vpack.c.b16 %v2054, %v2053
    %v2480 = vpack.c.b16 %v2056, %v2055
    %v2481 = vpack.c.b16 %v2058, %v2057
    %v2482 = vpack.c.b16 %v2060, %v2059
    %v2483 = vpack.c.b16 %v2062, %v2061
    %v2484 = vpack.c.b16 %v2064, %v2063
    %v2485 = vpack.c.b16 %v2066, %v2065
    %v2486 = vpack.c.b16 %v2068, %v2067
    %v2487 = vpack.c.b16 %v2070, %v2069
    %v2488 = vpack.c.b16 %v2072, %v2071
    %v2489 = vpack.c.b16 %v2074, %v2073
    %v2490 = vpack.c.b16 %v2076, %v2075
    %v2491 = vpack.c.b16 %v2078, %v2077
    %v2492 = vpack.c.b16 %v2080, %v2079
    %v2493 = vpack.c.b16 %v2082, %v2081
    %v2494 = vpack.c.b16 %v2084, %v2083
    %v2495 = vpack.c.b16 %v2086, %v2085
    %v2496 = vpack.c.b16 %v2088, %v2087
    %v2497 = vpack.c.b16 %v2090, %v2089
    %v2498 = vpack.c.b16 %v2092, %v2091
    %v2499 = vpack.c.b16 %v2094, %v2093
    %v2500 = vpack.c.b16 %v2096, %v2095
    %v2501 = vpack.c.b16 %v2098, %v2097
    %v2502 = vpack.c.b16 %v2100, %v2099
    %v2503 = vpack.c.b16 %v2102, %v2101
    %v2504 = vpack.c.b16 %v2104, %v2103
    %v2505 = vpack.c.b16 %v2106, %v2105
    %v2506 = vpack.c.b16 %v2108, %v2107
    %v2507 = vpack.c.b16 %v2110, %v2109
    %v2508 = vpack.c.b16 %v2112, %v2111
    %v2509 = vpack.c.b16 %v2114, %v2113
    %v2510 = vpack.c.b16 %v2116, %v2115
    %v2511 = vpack.c.b16 %v2118, %v2117
    %v2512 = vpack.c.b16 %v2120, %v2119
    %v2513 = vpack.c.b16 %v2122, %v2121
    %v2514 = vpack.c.b16 %v2124, %v2123
    %v2515 = vpack.c.b16 %v2126, %v2125
    %v2516 = vpack.c.b16 %v2128, %v2127
    %v2517 = vpack.c.b16 %v2130, %v2129
    %v2518 = vpack.c.b16 %v2132, %v2131
    %v2519 = vpack.c.b16 %v2134, %v2133
    %v2520 = vpack.c.b16 %v2136, %v2135
    %v2521 = vpack.c.b16 %v2138, %v2137
    %v2522 = vpack.c.b16 %v2140, %v2139
    %v2523 = vpack.c.b16 %v2142, %v2141
    %v2524 = vpack.c.b16 %v2144, %v2143
    %v2525 = vpack.c.b16 %v2146, %v2145
    %v2526 = vpack.c.b16 %v2148, %v2147
    %v2527 = vpack.c.b16 %v2150, %v2149
    %v2528 = vpack.c.b16 %v2152, %v2151
    %v2529 = vpack.c.b16 %v2154, %v2153
    %v2530 = vpack.c.b16 %v2156, %v2155
    %v2531 = vpack.c.b16 %v2158, %v2157
    %v2532 = vpack.c.b16 %v2160, %v2159
    %v2533 = vpack.c.b16 %v2162, %v2161
    %v2534 = vpack.c.b16 %v2164, %v2163
    %v2535 = vpack.c.b16 %v2166, %v2165
    %v2536 = vpack.c.b16 %v2168, %v2167
    %v2537 = vpack.c.b16 %v2170, %v2169
    %v2538 = vpack.c.b16 %v2172, %v2171
    %v2539 = vpack.c.b16 %v2174, %v2173
    %v2540 = vpack.c.b16 %v2176, %v2175
    %v2541 = vpack.c.b16 %v2178, %v2177
    %v2542 = vpack.c.b16 %v2180, %v2179
    %v2543 = vpack.c.b16 %v2182, %v2181
    %v2544 = vpack.c.b16 %v2184, %v2183
    %v2545 = vpack.c.b16 %v2186, %v2185
    %v2546 = vpack.c.b16 %v2188, %v2187
    %v2547 = vpack.c.b16 %v2190, %v2189
    %v2548 = vpack.c.b16 %v2192, %v2191
    %v2549 = vpack.c.b16 %v2194, %v2193
    %v2550 = vpack.c.b16 %v2196, %v2195
    %v2551 = vpack.c.b16 %v2198, %v2197
    %v2552 = vpack.c.b16 %v2200, %v2199
    %v2553 = vpack.c.b16 %v2202, %v2201
    %v2554 = vpack.c.b16 %v2204, %v2203
    %v2555 = vpack.c.b16 %v2206, %v2205
    %v2556 = vpack.c.b16 %v2208, %v2207
    %v2557 = vpack.c.b16 %v2210, %v2209
    %v2558 = vpack.c.b16 %v2212, %v2211
    %v2559 = vpack.c.b16 %v2214, %v2213
    %v2560 = vpack.c.b16 %v2216, %v2215
    %v2561 = vpack.c.b16 %v2218, %v2217
    %v2562 = vpack.c.b16 %v2220, %v2219
    %v2563 = vpack.c.b16 %v2222, %v2221
    %v2564 = vpack.c.b16 %v2224, %v2223
    %v2565 = vpack.c.b16 %v2226, %v2225
    %v2566 = vpack.c.b16 %v2228, %v2227
    %v2567 = vpack.c.b16 %v2230, %v2229
    %v2568 = vpack.c.b16 %v2232, %v2231
    %v2569 = vpack.c.b16 %v2234, %v2233
    %v2570 = vpack.c.b16 %v2236, %v2235
    %v2571 = vpack.c.b16 %v2238, %v2237
    %v2572 = vpack.c.b16 %v2240, %v2239
    %v2573 = vpack.c.b16 %v2242, %v2241
    %v2574 = vpack.c.b16 %v2244, %v2243
    %v2575 = vpack.c.b16 %v2246, %v2245
    %v2576 = vpack.c.b16 %v2248, %v2247
    %v2577 = vpack.c.b16 %v2250, %v2249
    %v2578 = vpack.c.b16 %v2252, %v2251
    %v2579 = vpack.c.b16 %v2254, %v2253
    %v2580 = vpack.c.b16 %v2256, %v2255
    %v2581 = vpack.c.b16 %v2258, %v2257
    %v2582 = vpack.c.b16 %v2260, %v2259
    %v2583 = vpack.c.b16 %v2262, %v2261
    %v2584 = vpack.c.b16 %v2264, %v2263
    %v2585 = vpack.c.b16 %v2266, %v2265
    %v2586 = vpack.c.b16 %v2268, %v2267
    %v2587 = vpack.c.b16 %v2270, %v2269
    %v2588 = vpack.c.b16 %v2272, %v2271
    %v2589 = vpack.c.b16 %v2274, %v2273
    %v2590 = vpack.c.b16 %v2276, %v2275
    %v2591 = vpack.c.b16 %v2278, %v2277
    %v2592 = vpack.c.b16 %v2280, %v2279
    %v2593 = vpack.c.b16 %v2282, %v2281
    %v2594 = vpack.c.b16 %v2284, %v2283
    %v2595 = vpack.c.b16 %v2286, %v2285
    %v2596 = vpack.c.b16 %v2288, %v2287
    %v2597 = vpack.c.b16 %v2290, %v2289
    %v2598 = vpack.c.b16 %v2292, %v2291
    %v2599 = vpack.c.b16 %v2294, %v2293
    %v2600 = vpack.c.b16 %v2296, %v2295
    %v2601 = vpack.c.b16 %v2298, %v2297
    %v2602 = vpack.c.b16 %v2300, %v2299
    %v2603 = vpack.c.b16 %v2302, %v2301
    %v2604 = vpack.c.b16 %v2304, %v2303
    %v2605 = vpack.c.b16 %v2306, %v2305
    %v2606 = vpack.c.b16 %v2308, %v2307
    %v2607 = vpack.c.b16 %v2310, %v2309
    %v2608 = vpack.c.b16 %v2312, %v2311
    %v2609 = vpack.c.b16 %v2314, %v2313
    %v2610 = vpack.c.b16 %v2316, %v2315
    %v2611 = vpack.c.b16 %v2318, %v2317
    %v2612 = vpack.c.b16 %v2320, %v2319
    %v2613 = vpack.c.b16 %v2322, %v2321
    %v2614 = vpack.c.b16 %v2324, %v2323
    %v2615 = vpack.c.b16 %v2326, %v2325
    %v2616 = vpack.c.b16 %v2328, %v2327
    %v2617 = vpack.c.b16 %v2330, %v2329
    %v2618 = vpack.c.b16 %v2332, %v2331
    %v2619 = vpack.c.b16 %v2334, %v2333
    %v2620 = vpack.c.b16 %v2336, %v2335
    %v2621 = vpack.c.b16 %v2338, %v2337
    %v2622 = vpack.c.b16 %v2340, %v2339
    %v2623 = vpack.c.b16 %v2342, %v2341
    %v2624 = vpack.c.b16 %v2344, %v2343
    %v2625 = vpack.c.b16 %v2346, %v2345
    %v2626 = vpack.c.b16 %v2348, %v2347
    %v2627 = vpack.c.b16 %v2350, %v2349
    %v2628 = vpack.c.b16 %v2352, %v2351
    %v2629 = vpack.c.b16 %v2354, %v2353
    %v2630 = vpack.c.b16 %v2356, %v2355
    %v2631 = vpack.c.b16 %v2358, %v2357
    %v2632 = vpack.c.b16 %v2360, %v2359
    %v2633 = vpack.c.b16 %v2362, %v2361
    %v2634 = vpack.c.b16 %v2364, %v2363
    %v2635 = vpack.c.b16 %v2366, %v2365
    %v2636 = vpack.c.b16 %v2368, %v2367
    %v2637 = vpack.c.b16 %v2370, %v2369
    %v2638 = vpack.c.b16 %v2372, %v2371
    %v2639 = vpack.c.b16 %v2374, %v2373
    %v2640 = vpack.c.b16 %v2376, %v2375
    %v2641 = vpack.c.b16 %v2378, %v2377
    %v2642 = vpack.c.b16 %v2380, %v2379
    %v2643 = vpack.c.b16 %v2382, %v2381
    %v2644 = vpack.c.b16 %v2384, %v2383
    %v2645 = vpack.c.b16 %v2386, %v2385
    %v2646 = vpack.c.b16 %v2388, %v2387
    %v2647 = vpack.c.b16 %v2390, %v2389
    %v2648 = vpack.c.b16 %v2392, %v2391
    %2905 = vmatprep.subr.bf16.mxu0 0
    %2906 = vmatpush1.bf16.msra.mxu0 %v2393
    %2907 = vmatprep.subr.bf16.mxu0 0
    %2908 = vmatpush1.bf16.msra.mxu0 %v2394
    %2909 = vmatprep.subr.bf16.mxu0 0
    %2910 = vmatpush1.bf16.msra.mxu0 %v2395
    %2911 = vmatprep.subr.bf16.mxu0 0
    %2912 = vmatpush1.bf16.msra.mxu0 %v2396
    %2913 = vmatprep.subr.bf16.mxu0 0
    %2914 = vmatpush1.bf16.msra.mxu0 %v2397
    %2915 = vmatprep.subr.bf16.mxu0 0
    %2916 = vmatpush1.bf16.msra.mxu0 %v2398
    %2917 = vmatprep.subr.bf16.mxu0 0
    %2918 = vmatpush1.bf16.msra.mxu0 %v2399
    %2919 = vmatprep.subr.bf16.mxu0 0
    %2920 = vmatpush1.bf16.msra.mxu0 %v2400
    %2921 = vmatprep.subr.bf16.mxu0 0
    %2922 = vmatpush1.bf16.msra.mxu0 %v2401
    %2923 = vmatprep.subr.bf16.mxu0 0
    %2924 = vmatpush1.bf16.msra.mxu0 %v2402
    %2925 = vmatprep.subr.bf16.mxu0 0
    %2926 = vmatpush1.bf16.msra.mxu0 %v2403
    %2927 = vmatprep.subr.bf16.mxu0 0
    %2928 = vmatpush1.bf16.msra.mxu0 %v2404
    %2929 = vmatprep.subr.bf16.mxu0 0
    %2930 = vmatpush1.bf16.msra.mxu0 %v2405
    %2931 = vmatprep.subr.bf16.mxu0 0
    %2932 = vmatpush1.bf16.msra.mxu0 %v2406
    %2933 = vmatprep.subr.bf16.mxu0 0
    %2934 = vmatpush1.bf16.msra.mxu0 %v2407
    %2935 = vmatprep.subr.bf16.mxu0 0
    %2936 = vmatpush1.bf16.msra.mxu0 %v2408
    %2937 = vmatprep.mubr.bf16.mxu0 %v819
    %2938 = vmatmul.mubr.bf16.gmra.mrb[0].mxu0 %v818
    %v2939 = vpop.f32.mrb[0].mxu0
    %v2940 = vadd.f32 %v1367, %v2939
    %v2941 = vpop.f32.mrb[0].mxu0
    %v2942 = vpop.f32.mrb[0].mxu0
    %v2943 = vadd.f32 %v1367, %v2942
    %v2944 = vpop.f32.mrb[0].mxu0
    %2945 = vdwg.mxu0
    %2946 = vmatprep.subr.bf16.mxu0 0
    %2947 = vmatpush1.bf16.msra.mxu0 %v2409
    %2948 = vmatprep.subr.bf16.mxu0 0
    %2949 = vmatpush1.bf16.msra.mxu0 %v2410
    %2950 = vmatprep.subr.bf16.mxu0 0
    %2951 = vmatpush1.bf16.msra.mxu0 %v2411
    %2952 = vmatprep.subr.bf16.mxu0 0
    %2953 = vmatpush1.bf16.msra.mxu0 %v2412
    %2954 = vmatprep.subr.bf16.mxu0 0
    %2955 = vmatpush1.bf16.msra.mxu0 %v2413
    %2956 = vmatprep.subr.bf16.mxu0 0
    %2957 = vmatpush1.bf16.msra.mxu0 %v2414
    %2958 = vmatprep.subr.bf16.mxu0 0
    %2959 = vmatpush1.bf16.msra.mxu0 %v2415
    %2960 = vmatprep.subr.bf16.mxu0 0
    %2961 = vmatpush1.bf16.msra.mxu0 %v2416
    %2962 = vmatprep.subr.bf16.mxu0 0
    %2963 = vmatpush1.bf16.msra.mxu0 %v2417
    %2964 = vmatprep.subr.bf16.mxu0 0
    %2965 = vmatpush1.bf16.msra.mxu0 %v2418
    %2966 = vmatprep.subr.bf16.mxu0 0
    %2967 = vmatpush1.bf16.msra.mxu0 %v2419
    %2968 = vmatprep.subr.bf16.mxu0 0
    %2969 = vmatpush1.bf16.msra.mxu0 %v2420
    %2970 = vmatprep.subr.bf16.mxu0 0
    %2971 = vmatpush1.bf16.msra.mxu0 %v2421
    %2972 = vmatprep.subr.bf16.mxu0 0
    %2973 = vmatpush1.bf16.msra.mxu0 %v2422
    %2974 = vmatprep.subr.bf16.mxu0 0
    %2975 = vmatpush1.bf16.msra.mxu0 %v2423
    %2976 = vmatprep.subr.bf16.mxu0 0
    %2977 = vmatpush1.bf16.msra.mxu0 %v2424
    %2978 = vmatprep.mubr.bf16.mxu0 %v821
    %2979 = vmatmul.mubr.bf16.gmra.mrb[0].mxu0 %v820
    %v2980 = vpop.f32.mrb[0].mxu0
    %v2981 = vadd.f32 %v2940, %v2980
    %v2982 = vpop.f32.mrb[0].mxu0
    %v2983 = vpop.f32.mrb[0].mxu0
    %v2984 = vadd.f32 %v2943, %v2983
    %v2985 = vpop.f32.mrb[0].mxu0
    %2986 = vdwg.mxu0
    %2987 = vmatprep.subr.bf16.mxu0 0
    %2988 = vmatpush1.bf16.msra.mxu0 %v2425
    %2989 = vmatprep.subr.bf16.mxu0 0
    %2990 = vmatpush1.bf16.msra.mxu0 %v2426
    %2991 = vmatprep.subr.bf16.mxu0 0
    %2992 = vmatpush1.bf16.msra.mxu0 %v2427
    %2993 = vmatprep.subr.bf16.mxu0 0
    %2994 = vmatpush1.bf16.msra.mxu0 %v2428
    %2995 = vmatprep.subr.bf16.mxu0 0
    %2996 = vmatpush1.bf16.msra.mxu0 %v2429
    %2997 = vmatprep.subr.bf16.mxu0 0
    %2998 = vmatpush1.bf16.msra.mxu0 %v2430
    %2999 = vmatprep.subr.bf16.mxu0 0
    %3000 = vmatpush1.bf16.msra.mxu0 %v2431
    %3001 = vmatprep.subr.bf16.mxu0 0
    %3002 = vmatpush1.bf16.msra.mxu0 %v2432
    %3003 = vmatprep.subr.bf16.mxu0 0
    %3004 = vmatpush1.bf16.msra.mxu0 %v2433
    %3005 = vmatprep.subr.bf16.mxu0 0
    %3006 = vmatpush1.bf16.msra.mxu0 %v2434
    %3007 = vmatprep.subr.bf16.mxu0 0
    %3008 = vmatpush1.bf16.msra.mxu0 %v2435
    %3009 = vmatprep.subr.bf16.mxu0 0
    %3010 = vmatpush1.bf16.msra.mxu0 %v2436
    %3011 = vmatprep.subr.bf16.mxu0 0
    %3012 = vmatpush1.bf16.msra.mxu0 %v2437
    %3013 = vmatprep.subr.bf16.mxu0 0
    %3014 = vmatpush1.bf16.msra.mxu0 %v2438
    %3015 = vmatprep.subr.bf16.mxu0 0
    %3016 = vmatpush1.bf16.msra.mxu0 %v2439
    %3017 = vmatprep.subr.bf16.mxu0 0
    %3018 = vmatpush1.bf16.msra.mxu0 %v2440
    %3019 = vmatprep.mubr.bf16.mxu0 %v823
    %3020 = vmatmul.mubr.bf16.gmra.mrb[0].mxu0 %v822
    %v3021 = vpop.f32.mrb[0].mxu0
    %v3022 = vadd.f32 %v2981, %v3021
    %v3023 = vpop.f32.mrb[0].mxu0
    %v3024 = vpop.f32.mrb[0].mxu0
    %v3025 = vadd.f32 %v2984, %v3024
    %v3026 = vpop.f32.mrb[0].mxu0
    %3027 = vdwg.mxu0
    %3028 = vmatprep.subr.bf16.mxu0 0
    %3029 = vmatpush1.bf16.msra.mxu0 %v2441
    %3030 = vmatprep.subr.bf16.mxu0 0
    %3031 = vmatpush1.bf16.msra.mxu0 %v2442
    %3032 = vmatprep.subr.bf16.mxu0 0
    %3033 = vmatpush1.bf16.msra.mxu0 %v2443
    %3034 = vmatprep.subr.bf16.mxu0 0
    %3035 = vmatpush1.bf16.msra.mxu0 %v2444
    %3036 = vmatprep.subr.bf16.mxu0 0
    %3037 = vmatpush1.bf16.msra.mxu0 %v2445
    %3038 = vmatprep.subr.bf16.mxu0 0
    %3039 = vmatpush1.bf16.msra.mxu0 %v2446
    %3040 = vmatprep.subr.bf16.mxu0 0
    %3041 = vmatpush1.bf16.msra.mxu0 %v2447
    %3042 = vmatprep.subr.bf16.mxu0 0
    %3043 = vmatpush1.bf16.msra.mxu0 %v2448
    %3044 = vmatprep.subr.bf16.mxu0 0
    %3045 = vmatpush1.bf16.msra.mxu0 %v2449
    %3046 = vmatprep.subr.bf16.mxu0 0
    %3047 = vmatpush1.bf16.msra.mxu0 %v2450
    %3048 = vmatprep.subr.bf16.mxu0 0
    %3049 = vmatpush1.bf16.msra.mxu0 %v2451
    %3050 = vmatprep.subr.bf16.mxu0 0
    %3051 = vmatpush1.bf16.msra.mxu0 %v2452
    %3052 = vmatprep.subr.bf16.mxu0 0
    %3053 = vmatpush1.bf16.msra.mxu0 %v2453
    %3054 = vmatprep.subr.bf16.mxu0 0
    %3055 = vmatpush1.bf16.msra.mxu0 %v2454
    %3056 = vmatprep.subr.bf16.mxu0 0
    %3057 = vmatpush1.bf16.msra.mxu0 %v2455
    %3058 = vmatprep.subr.bf16.mxu0 0
    %3059 = vmatpush1.bf16.msra.mxu0 %v2456
    %3060 = vmatprep.mubr.bf16.mxu0 %v825
    %3061 = vmatmul.mubr.bf16.gmra.mrb[0].mxu0 %v824
    %v3062 = vpop.f32.mrb[0].mxu0
    %v3063 = vadd.f32 %v3022, %v3062
    %v3064 = vpop.f32.mrb[0].mxu0
    %v3065 = vpop.f32.mrb[0].mxu0
    %v3066 = vadd.f32 %v3025, %v3065
    %v3067 = vpop.f32.mrb[0].mxu0
    %3068 = vdwg.mxu0
    %3069 = vmatprep.subr.bf16.mxu0 0
    %3070 = vmatpush1.bf16.msra.mxu0 %v2457
    %3071 = vmatprep.subr.bf16.mxu0 0
    %3072 = vmatpush1.bf16.msra.mxu0 %v2458
    %3073 = vmatprep.subr.bf16.mxu0 0
    %3074 = vmatpush1.bf16.msra.mxu0 %v2459
    %3075 = vmatprep.subr.bf16.mxu0 0
    %3076 = vmatpush1.bf16.msra.mxu0 %v2460
    %3077 = vmatprep.subr.bf16.mxu0 0
    %3078 = vmatpush1.bf16.msra.mxu0 %v2461
    %3079 = vmatprep.subr.bf16.mxu0 0
    %3080 = vmatpush1.bf16.msra.mxu0 %v2462
    %3081 = vmatprep.subr.bf16.mxu0 0
    %3082 = vmatpush1.bf16.msra.mxu0 %v2463
    %3083 = vmatprep.subr.bf16.mxu0 0
    %3084 = vmatpush1.bf16.msra.mxu0 %v2464
    %3085 = vmatprep.subr.bf16.mxu0 0
    %3086 = vmatpush1.bf16.msra.mxu0 %v2465
    %3087 = vmatprep.subr.bf16.mxu0 0
    %3088 = vmatpush1.bf16.msra.mxu0 %v2466
    %3089 = vmatprep.subr.bf16.mxu0 0
    %3090 = vmatpush1.bf16.msra.mxu0 %v2467
    %3091 = vmatprep.subr.bf16.mxu0 0
    %3092 = vmatpush1.bf16.msra.mxu0 %v2468
    %3093 = vmatprep.subr.bf16.mxu0 0
    %3094 = vmatpush1.bf16.msra.mxu0 %v2469
    %3095 = vmatprep.subr.bf16.mxu0 0
    %3096 = vmatpush1.bf16.msra.mxu0 %v2470
    %3097 = vmatprep.subr.bf16.mxu0 0
    %3098 = vmatpush1.bf16.msra.mxu0 %v2471
    %3099 = vmatprep.subr.bf16.mxu0 0
    %3100 = vmatpush1.bf16.msra.mxu0 %v2472
    %3101 = vmatprep.mubr.bf16.mxu0 %v827
    %3102 = vmatmul.mubr.bf16.gmra.mrb[0].mxu0 %v826
    %v3103 = vpop.f32.mrb[0].mxu0
    %v3104 = vadd.f32 %v3063, %v3103
    %v3105 = vpop.f32.mrb[0].mxu0
    %v3106 = vpop.f32.mrb[0].mxu0
    %v3107 = vadd.f32 %v3066, %v3106
    %v3108 = vpop.f32.mrb[0].mxu0
    %3109 = vdwg.mxu0
    %3110 = vmatprep.subr.bf16.mxu0 0
    %3111 = vmatpush1.bf16.msra.mxu0 %v2473
    %3112 = vmatprep.subr.bf16.mxu0 0
    %3113 = vmatpush1.bf16.msra.mxu0 %v2474
    %3114 = vmatprep.subr.bf16.mxu0 0
    %3115 = vmatpush1.bf16.msra.mxu0 %v2475
    %3116 = vmatprep.subr.bf16.mxu0 0
    %3117 = vmatpush1.bf16.msra.mxu0 %v2476
    %3118 = vmatprep.subr.bf16.mxu0 0
    %3119 = vmatpush1.bf16.msra.mxu0 %v2477
    %3120 = vmatprep.subr.bf16.mxu0 0
    %3121 = vmatpush1.bf16.msra.mxu0 %v2478
    %3122 = vmatprep.subr.bf16.mxu0 0
    %3123 = vmatpush1.bf16.msra.mxu0 %v2479
    %3124 = vmatprep.subr.bf16.mxu0 0
    %3125 = vmatpush1.bf16.msra.mxu0 %v2480
    %3126 = vmatprep.subr.bf16.mxu0 0
    %3127 = vmatpush1.bf16.msra.mxu0 %v2481
    %3128 = vmatprep.subr.bf16.mxu0 0
    %3129 = vmatpush1.bf16.msra.mxu0 %v2482
    %3130 = vmatprep.subr.bf16.mxu0 0
    %3131 = vmatpush1.bf16.msra.mxu0 %v2483
    %3132 = vmatprep.subr.bf16.mxu0 0
    %3133 = vmatpush1.bf16.msra.mxu0 %v2484
    %3134 = vmatprep.subr.bf16.mxu0 0
    %3135 = vmatpush1.bf16.msra.mxu0 %v2485
    %3136 = vmatprep.subr.bf16.mxu0 0
    %3137 = vmatpush1.bf16.msra.mxu0 %v2486
    %3138 = vmatprep.subr.bf16.mxu0 0
    %3139 = vmatpush1.bf16.msra.mxu0 %v2487
    %3140 = vmatprep.subr.bf16.mxu0 0
    %3141 = vmatpush1.bf16.msra.mxu0 %v2488
    %3142 = vmatprep.mubr.bf16.mxu0 %v829
    %3143 = vmatmul.mubr.bf16.gmra.mrb[0].mxu0 %v828
    %v3144 = vpop.f32.mrb[0].mxu0
    %v3145 = vadd.f32 %v3104, %v3144
    %v3146 = vpop.f32.mrb[0].mxu0
    %v3147 = vpop.f32.mrb[0].mxu0
    %v3148 = vadd.f32 %v3107, %v3147
    %v3149 = vpop.f32.mrb[0].mxu0
    %3150 = vdwg.mxu0
    %3151 = vmatprep.subr.bf16.mxu0 0
    %3152 = vmatpush1.bf16.msra.mxu0 %v2489
    %3153 = vmatprep.subr.bf16.mxu0 0
    %3154 = vmatpush1.bf16.msra.mxu0 %v2490
    %3155 = vmatprep.subr.bf16.mxu0 0
    %3156 = vmatpush1.bf16.msra.mxu0 %v2491
    %3157 = vmatprep.subr.bf16.mxu0 0
    %3158 = vmatpush1.bf16.msra.mxu0 %v2492
    %3159 = vmatprep.subr.bf16.mxu0 0
    %3160 = vmatpush1.bf16.msra.mxu0 %v2493
    %3161 = vmatprep.subr.bf16.mxu0 0
    %3162 = vmatpush1.bf16.msra.mxu0 %v2494
    %3163 = vmatprep.subr.bf16.mxu0 0
    %3164 = vmatpush1.bf16.msra.mxu0 %v2495
    %3165 = vmatprep.subr.bf16.mxu0 0
    %3166 = vmatpush1.bf16.msra.mxu0 %v2496
    %3167 = vmatprep.subr.bf16.mxu0 0
    %3168 = vmatpush1.bf16.msra.mxu0 %v2497
    %3169 = vmatprep.subr.bf16.mxu0 0
    %3170 = vmatpush1.bf16.msra.mxu0 %v2498
    %3171 = vmatprep.subr.bf16.mxu0 0
    %3172 = vmatpush1.bf16.msra.mxu0 %v2499
    %3173 = vmatprep.subr.bf16.mxu0 0
    %3174 = vmatpush1.bf16.msra.mxu0 %v2500
    %3175 = vmatprep.subr.bf16.mxu0 0
    %3176 = vmatpush1.bf16.msra.mxu0 %v2501
    %3177 = vmatprep.subr.bf16.mxu0 0
    %3178 = vmatpush1.bf16.msra.mxu0 %v2502
    %3179 = vmatprep.subr.bf16.mxu0 0
    %3180 = vmatpush1.bf16.msra.mxu0 %v2503
    %3181 = vmatprep.subr.bf16.mxu0 0
    %3182 = vmatpush1.bf16.msra.mxu0 %v2504
    %3183 = vmatprep.mubr.bf16.mxu0 %v831
    %3184 = vmatmul.mubr.bf16.gmra.mrb[0].mxu0 %v830
    %v3185 = vpop.f32.mrb[0].mxu0
    %v3186 = vadd.f32 %v3145, %v3185
    %v3187 = vpop.f32.mrb[0].mxu0
    %v3188 = vpop.f32.mrb[0].mxu0
    %v3189 = vadd.f32 %v3148, %v3188
    %v3190 = vpop.f32.mrb[0].mxu0
    %3191 = vdwg.mxu0
    %3192 = vmatprep.subr.bf16.mxu0 0
    %3193 = vmatpush1.bf16.msra.mxu0 %v2505
    %3194 = vmatprep.subr.bf16.mxu0 0
    %3195 = vmatpush1.bf16.msra.mxu0 %v2506
    %3196 = vmatprep.subr.bf16.mxu0 0
    %3197 = vmatpush1.bf16.msra.mxu0 %v2507
    %3198 = vmatprep.subr.bf16.mxu0 0
    %3199 = vmatpush1.bf16.msra.mxu0 %v2508
    %3200 = vmatprep.subr.bf16.mxu0 0
    %3201 = vmatpush1.bf16.msra.mxu0 %v2509
    %3202 = vmatprep.subr.bf16.mxu0 0
    %3203 = vmatpush1.bf16.msra.mxu0 %v2510
    %3204 = vmatprep.subr.bf16.mxu0 0
    %3205 = vmatpush1.bf16.msra.mxu0 %v2511
    %3206 = vmatprep.subr.bf16.mxu0 0
    %3207 = vmatpush1.bf16.msra.mxu0 %v2512
    %3208 = vmatprep.subr.bf16.mxu0 0
    %3209 = vmatpush1.bf16.msra.mxu0 %v2513
    %3210 = vmatprep.subr.bf16.mxu0 0
    %3211 = vmatpush1.bf16.msra.mxu0 %v2514
    %3212 = vmatprep.subr.bf16.mxu0 0
    %3213 = vmatpush1.bf16.msra.mxu0 %v2515
    %3214 = vmatprep.subr.bf16.mxu0 0
    %3215 = vmatpush1.bf16.msra.mxu0 %v2516
    %3216 = vmatprep.subr.bf16.mxu0 0
    %3217 = vmatpush1.bf16.msra.mxu0 %v2517
    %3218 = vmatprep.subr.bf16.mxu0 0
    %3219 = vmatpush1.bf16.msra.mxu0 %v2518
    %3220 = vmatprep.subr.bf16.mxu0 0
    %3221 = vmatpush1.bf16.msra.mxu0 %v2519
    %3222 = vmatprep.subr.bf16.mxu0 0
    %3223 = vmatpush1.bf16.msra.mxu0 %v2520
    %3224 = vmatprep.mubr.bf16.mxu0 %v833
    %3225 = vmatmul.mubr.bf16.gmra.mrb[0].mxu0 %v832
    %v3226 = vpop.f32.mrb[0].mxu0
    %v3227 = vadd.f32 %v3186, %v3226
    %v3228 = vpop.f32.mrb[0].mxu0
    %v3229 = vpop.f32.mrb[0].mxu0
    %v3230 = vadd.f32 %v3189, %v3229
    %v3231 = vpop.f32.mrb[0].mxu0
    %3232 = vdwg.mxu0
    %3233 = vmatprep.subr.bf16.mxu0 0
    %3234 = vmatpush1.bf16.msra.mxu0 %v2521
    %3235 = vmatprep.subr.bf16.mxu0 0
    %3236 = vmatpush1.bf16.msra.mxu0 %v2522
    %3237 = vmatprep.subr.bf16.mxu0 0
    %3238 = vmatpush1.bf16.msra.mxu0 %v2523
    %3239 = vmatprep.subr.bf16.mxu0 0
    %3240 = vmatpush1.bf16.msra.mxu0 %v2524
    %3241 = vmatprep.subr.bf16.mxu0 0
    %3242 = vmatpush1.bf16.msra.mxu0 %v2525
    %3243 = vmatprep.subr.bf16.mxu0 0
    %3244 = vmatpush1.bf16.msra.mxu0 %v2526
    %3245 = vmatprep.subr.bf16.mxu0 0
    %3246 = vmatpush1.bf16.msra.mxu0 %v2527
    %3247 = vmatprep.subr.bf16.mxu0 0
    %3248 = vmatpush1.bf16.msra.mxu0 %v2528
    %3249 = vmatprep.subr.bf16.mxu0 0
    %3250 = vmatpush1.bf16.msra.mxu0 %v2529
    %3251 = vmatprep.subr.bf16.mxu0 0
    %3252 = vmatpush1.bf16.msra.mxu0 %v2530
    %3253 = vmatprep.subr.bf16.mxu0 0
    %3254 = vmatpush1.bf16.msra.mxu0 %v2531
    %3255 = vmatprep.subr.bf16.mxu0 0
    %3256 = vmatpush1.bf16.msra.mxu0 %v2532
    %3257 = vmatprep.subr.bf16.mxu0 0
    %3258 = vmatpush1.bf16.msra.mxu0 %v2533
    %3259 = vmatprep.subr.bf16.mxu0 0
    %3260 = vmatpush1.bf16.msra.mxu0 %v2534
    %3261 = vmatprep.subr.bf16.mxu0 0
    %3262 = vmatpush1.bf16.msra.mxu0 %v2535
    %3263 = vmatprep.subr.bf16.mxu0 0
    %3264 = vmatpush1.bf16.msra.mxu0 %v2536
    %3265 = vmatprep.mubr.bf16.mxu0 %v835
    %3266 = vmatmul.mubr.bf16.gmra.mrb[0].mxu0 %v834
    %v3267 = vpop.f32.mrb[0].mxu0
    %v3268 = vadd.f32 %v3227, %v3267
    %v3269 = vpop.f32.mrb[0].mxu0
    %v3270 = vpop.f32.mrb[0].mxu0
    %v3271 = vadd.f32 %v3230, %v3270
    %v3272 = vpop.f32.mrb[0].mxu0
    %3273 = vdwg.mxu0
    %3274 = vmatprep.subr.bf16.mxu0 0
    %3275 = vmatpush1.bf16.msra.mxu0 %v2537
    %3276 = vmatprep.subr.bf16.mxu0 0
    %3277 = vmatpush1.bf16.msra.mxu0 %v2538
    %3278 = vmatprep.subr.bf16.mxu0 0
    %3279 = vmatpush1.bf16.msra.mxu0 %v2539
    %3280 = vmatprep.subr.bf16.mxu0 0
    %3281 = vmatpush1.bf16.msra.mxu0 %v2540
    %3282 = vmatprep.subr.bf16.mxu0 0
    %3283 = vmatpush1.bf16.msra.mxu0 %v2541
    %3284 = vmatprep.subr.bf16.mxu0 0
    %3285 = vmatpush1.bf16.msra.mxu0 %v2542
    %3286 = vmatprep.subr.bf16.mxu0 0
    %3287 = vmatpush1.bf16.msra.mxu0 %v2543
    %3288 = vmatprep.subr.bf16.mxu0 0
    %3289 = vmatpush1.bf16.msra.mxu0 %v2544
    %3290 = vmatprep.subr.bf16.mxu0 0
    %3291 = vmatpush1.bf16.msra.mxu0 %v2545
    %3292 = vmatprep.subr.bf16.mxu0 0
    %3293 = vmatpush1.bf16.msra.mxu0 %v2546
    %3294 = vmatprep.subr.bf16.mxu0 0
    %3295 = vmatpush1.bf16.msra.mxu0 %v2547
    %3296 = vmatprep.subr.bf16.mxu0 0
    %3297 = vmatpush1.bf16.msra.mxu0 %v2548
    %3298 = vmatprep.subr.bf16.mxu0 0
    %3299 = vmatpush1.bf16.msra.mxu0 %v2549
    %3300 = vmatprep.subr.bf16.mxu0 0
    %3301 = vmatpush1.bf16.msra.mxu0 %v2550
    %3302 = vmatprep.subr.bf16.mxu0 0
    %3303 = vmatpush1.bf16.msra.mxu0 %v2551
    %3304 = vmatprep.subr.bf16.mxu0 0
    %3305 = vmatpush1.bf16.msra.mxu0 %v2552
    %3306 = vmatprep.mubr.bf16.mxu0 %v837
    %3307 = vmatmul.mubr.bf16.gmra.mrb[0].mxu0 %v836
    %v3308 = vpop.f32.mrb[0].mxu0
    %v3309 = vadd.f32 %v3268, %v3308
    %v3310 = vpop.f32.mrb[0].mxu0
    %v3311 = vpop.f32.mrb[0].mxu0
    %v3312 = vadd.f32 %v3271, %v3311
    %v3313 = vpop.f32.mrb[0].mxu0
    %3314 = vdwg.mxu0
    %3315 = vmatprep.subr.bf16.mxu0 0
    %3316 = vmatpush1.bf16.msra.mxu0 %v2553
    %3317 = vmatprep.subr.bf16.mxu0 0
    %3318 = vmatpush1.bf16.msra.mxu0 %v2554
    %3319 = vmatprep.subr.bf16.mxu0 0
    %3320 = vmatpush1.bf16.msra.mxu0 %v2555
    %3321 = vmatprep.subr.bf16.mxu0 0
    %3322 = vmatpush1.bf16.msra.mxu0 %v2556
    %3323 = vmatprep.subr.bf16.mxu0 0
    %3324 = vmatpush1.bf16.msra.mxu0 %v2557
    %3325 = vmatprep.subr.bf16.mxu0 0
    %3326 = vmatpush1.bf16.msra.mxu0 %v2558
    %3327 = vmatprep.subr.bf16.mxu0 0
    %3328 = vmatpush1.bf16.msra.mxu0 %v2559
    %3329 = vmatprep.subr.bf16.mxu0 0
    %3330 = vmatpush1.bf16.msra.mxu0 %v2560
    %3331 = vmatprep.subr.bf16.mxu0 0
    %3332 = vmatpush1.bf16.msra.mxu0 %v2561
    %3333 = vmatprep.subr.bf16.mxu0 0
    %3334 = vmatpush1.bf16.msra.mxu0 %v2562
    %3335 = vmatprep.subr.bf16.mxu0 0
    %3336 = vmatpush1.bf16.msra.mxu0 %v2563
    %3337 = vmatprep.subr.bf16.mxu0 0
    %3338 = vmatpush1.bf16.msra.mxu0 %v2564
    %3339 = vmatprep.subr.bf16.mxu0 0
    %3340 = vmatpush1.bf16.msra.mxu0 %v2565
    %3341 = vmatprep.subr.bf16.mxu0 0
    %3342 = vmatpush1.bf16.msra.mxu0 %v2566
    %3343 = vmatprep.subr.bf16.mxu0 0
    %3344 = vmatpush1.bf16.msra.mxu0 %v2567
    %3345 = vmatprep.subr.bf16.mxu0 0
    %3346 = vmatpush1.bf16.msra.mxu0 %v2568
    %3347 = vmatprep.mubr.bf16.mxu0 %v839
    %3348 = vmatmul.mubr.bf16.gmra.mrb[0].mxu0 %v838
    %v3349 = vpop.f32.mrb[0].mxu0
    %v3350 = vadd.f32 %v3309, %v3349
    %v3351 = vpop.f32.mrb[0].mxu0
    %v3352 = vpop.f32.mrb[0].mxu0
    %v3353 = vadd.f32 %v3312, %v3352
    %v3354 = vpop.f32.mrb[0].mxu0
    %3355 = vdwg.mxu0
    %3356 = vmatprep.subr.bf16.mxu0 0
    %3357 = vmatpush1.bf16.msra.mxu0 %v2569
    %3358 = vmatprep.subr.bf16.mxu0 0
    %3359 = vmatpush1.bf16.msra.mxu0 %v2570
    %3360 = vmatprep.subr.bf16.mxu0 0
    %3361 = vmatpush1.bf16.msra.mxu0 %v2571
    %3362 = vmatprep.subr.bf16.mxu0 0
    %3363 = vmatpush1.bf16.msra.mxu0 %v2572
    %3364 = vmatprep.subr.bf16.mxu0 0
    %3365 = vmatpush1.bf16.msra.mxu0 %v2573
    %3366 = vmatprep.subr.bf16.mxu0 0
    %3367 = vmatpush1.bf16.msra.mxu0 %v2574
    %3368 = vmatprep.subr.bf16.mxu0 0
    %3369 = vmatpush1.bf16.msra.mxu0 %v2575
    %3370 = vmatprep.subr.bf16.mxu0 0
    %3371 = vmatpush1.bf16.msra.mxu0 %v2576
    %3372 = vmatprep.subr.bf16.mxu0 0
    %3373 = vmatpush1.bf16.msra.mxu0 %v2577
    %3374 = vmatprep.subr.bf16.mxu0 0
    %3375 = vmatpush1.bf16.msra.mxu0 %v2578
    %3376 = vmatprep.subr.bf16.mxu0 0
    %3377 = vmatpush1.bf16.msra.mxu0 %v2579
    %3378 = vmatprep.subr.bf16.mxu0 0
    %3379 = vmatpush1.bf16.msra.mxu0 %v2580
    %3380 = vmatprep.subr.bf16.mxu0 0
    %3381 = vmatpush1.bf16.msra.mxu0 %v2581
    %3382 = vmatprep.subr.bf16.mxu0 0
    %3383 = vmatpush1.bf16.msra.mxu0 %v2582
    %3384 = vmatprep.subr.bf16.mxu0 0
    %3385 = vmatpush1.bf16.msra.mxu0 %v2583
    %3386 = vmatprep.subr.bf16.mxu0 0
    %3387 = vmatpush1.bf16.msra.mxu0 %v2584
    %3388 = vmatprep.mubr.bf16.mxu0 %v841
    %3389 = vmatmul.mubr.bf16.gmra.mrb[0].mxu0 %v840
    %v3390 = vpop.f32.mrb[0].mxu0
    %v3391 = vadd.f32 %v3350, %v3390
    %v3392 = vpop.f32.mrb[0].mxu0
    %v3393 = vpop.f32.mrb[0].mxu0
    %v3394 = vadd.f32 %v3353, %v3393
    %v3395 = vpop.f32.mrb[0].mxu0
    %3396 = vdwg.mxu0
    %3397 = vmatprep.subr.bf16.mxu0 0
    %3398 = vmatpush1.bf16.msra.mxu0 %v2585
    %3399 = vmatprep.subr.bf16.mxu0 0
    %3400 = vmatpush1.bf16.msra.mxu0 %v2586
    %3401 = vmatprep.subr.bf16.mxu0 0
    %3402 = vmatpush1.bf16.msra.mxu0 %v2587
    %3403 = vmatprep.subr.bf16.mxu0 0
    %3404 = vmatpush1.bf16.msra.mxu0 %v2588
    %3405 = vmatprep.subr.bf16.mxu0 0
    %3406 = vmatpush1.bf16.msra.mxu0 %v2589
    %3407 = vmatprep.subr.bf16.mxu0 0
    %3408 = vmatpush1.bf16.msra.mxu0 %v2590
    %3409 = vmatprep.subr.bf16.mxu0 0
    %3410 = vmatpush1.bf16.msra.mxu0 %v2591
    %3411 = vmatprep.subr.bf16.mxu0 0
    %3412 = vmatpush1.bf16.msra.mxu0 %v2592
    %3413 = vmatprep.subr.bf16.mxu0 0
    %3414 = vmatpush1.bf16.msra.mxu0 %v2593
    %3415 = vmatprep.subr.bf16.mxu0 0
    %3416 = vmatpush1.bf16.msra.mxu0 %v2594
    %3417 = vmatprep.subr.bf16.mxu0 0
    %3418 = vmatpush1.bf16.msra.mxu0 %v2595
    %3419 = vmatprep.subr.bf16.mxu0 0
    %3420 = vmatpush1.bf16.msra.mxu0 %v2596
    %3421 = vmatprep.subr.bf16.mxu0 0
    %3422 = vmatpush1.bf16.msra.mxu0 %v2597
    %3423 = vmatprep.subr.bf16.mxu0 0
    %3424 = vmatpush1.bf16.msra.mxu0 %v2598
    %3425 = vmatprep.subr.bf16.mxu0 0
    %3426 = vmatpush1.bf16.msra.mxu0 %v2599
    %3427 = vmatprep.subr.bf16.mxu0 0
    %3428 = vmatpush1.bf16.msra.mxu0 %v2600
    %3429 = vmatprep.mubr.bf16.mxu0 %v843
    %3430 = vmatmul.mubr.bf16.gmra.mrb[0].mxu0 %v842
    %v3431 = vpop.f32.mrb[0].mxu0
    %v3432 = vadd.f32 %v3391, %v3431
    %v3433 = vpop.f32.mrb[0].mxu0
    %v3434 = vpop.f32.mrb[0].mxu0
    %v3435 = vadd.f32 %v3394, %v3434
    %v3436 = vpop.f32.mrb[0].mxu0
    %3437 = vdwg.mxu0
    %3438 = vmatprep.subr.bf16.mxu0 0
    %3439 = vmatpush1.bf16.msra.mxu0 %v2601
    %3440 = vmatprep.subr.bf16.mxu0 0
    %3441 = vmatpush1.bf16.msra.mxu0 %v2602
    %3442 = vmatprep.subr.bf16.mxu0 0
    %3443 = vmatpush1.bf16.msra.mxu0 %v2603
    %3444 = vmatprep.subr.bf16.mxu0 0
    %3445 = vmatpush1.bf16.msra.mxu0 %v2604
    %3446 = vmatprep.subr.bf16.mxu0 0
    %3447 = vmatpush1.bf16.msra.mxu0 %v2605
    %3448 = vmatprep.subr.bf16.mxu0 0
    %3449 = vmatpush1.bf16.msra.mxu0 %v2606
    %3450 = vmatprep.subr.bf16.mxu0 0
    %3451 = vmatpush1.bf16.msra.mxu0 %v2607
    %3452 = vmatprep.subr.bf16.mxu0 0
    %3453 = vmatpush1.bf16.msra.mxu0 %v2608
    %3454 = vmatprep.subr.bf16.mxu0 0
    %3455 = vmatpush1.bf16.msra.mxu0 %v2609
    %3456 = vmatprep.subr.bf16.mxu0 0
    %3457 = vmatpush1.bf16.msra.mxu0 %v2610
    %3458 = vmatprep.subr.bf16.mxu0 0
    %3459 = vmatpush1.bf16.msra.mxu0 %v2611
    %3460 = vmatprep.subr.bf16.mxu0 0
    %3461 = vmatpush1.bf16.msra.mxu0 %v2612
    %3462 = vmatprep.subr.bf16.mxu0 0
    %3463 = vmatpush1.bf16.msra.mxu0 %v2613
    %3464 = vmatprep.subr.bf16.mxu0 0
    %3465 = vmatpush1.bf16.msra.mxu0 %v2614
    %3466 = vmatprep.subr.bf16.mxu0 0
    %3467 = vmatpush1.bf16.msra.mxu0 %v2615
    %3468 = vmatprep.subr.bf16.mxu0 0
    %3469 = vmatpush1.bf16.msra.mxu0 %v2616
    %3470 = vmatprep.mubr.bf16.mxu0 %v845
    %3471 = vmatmul.mubr.bf16.gmra.mrb[0].mxu0 %v844
    %v3472 = vpop.f32.mrb[0].mxu0
    %v3473 = vadd.f32 %v3432, %v3472
    %v3474 = vpop.f32.mrb[0].mxu0
    %v3475 = vpop.f32.mrb[0].mxu0
    %v3476 = vadd.f32 %v3435, %v3475
    %v3477 = vpop.f32.mrb[0].mxu0
    %3478 = vdwg.mxu0
    %3479 = vmatprep.subr.bf16.mxu0 0
    %3480 = vmatpush1.bf16.msra.mxu0 %v2617
    %3481 = vmatprep.subr.bf16.mxu0 0
    %3482 = vmatpush1.bf16.msra.mxu0 %v2618
    %3483 = vmatprep.subr.bf16.mxu0 0
    %3484 = vmatpush1.bf16.msra.mxu0 %v2619
    %3485 = vmatprep.subr.bf16.mxu0 0
    %3486 = vmatpush1.bf16.msra.mxu0 %v2620
    %3487 = vmatprep.subr.bf16.mxu0 0
    %3488 = vmatpush1.bf16.msra.mxu0 %v2621
    %3489 = vmatprep.subr.bf16.mxu0 0
    %3490 = vmatpush1.bf16.msra.mxu0 %v2622
    %3491 = vmatprep.subr.bf16.mxu0 0
    %3492 = vmatpush1.bf16.msra.mxu0 %v2623
    %3493 = vmatprep.subr.bf16.mxu0 0
    %3494 = vmatpush1.bf16.msra.mxu0 %v2624
    %3495 = vmatprep.subr.bf16.mxu0 0
    %3496 = vmatpush1.bf16.msra.mxu0 %v2625
    %3497 = vmatprep.subr.bf16.mxu0 0
    %3498 = vmatpush1.bf16.msra.mxu0 %v2626
    %3499 = vmatprep.subr.bf16.mxu0 0
    %3500 = vmatpush1.bf16.msra.mxu0 %v2627
    %3501 = vmatprep.subr.bf16.mxu0 0
    %3502 = vmatpush1.bf16.msra.mxu0 %v2628
    %3503 = vmatprep.subr.bf16.mxu0 0
    %3504 = vmatpush1.bf16.msra.mxu0 %v2629
    %3505 = vmatprep.subr.bf16.mxu0 0
    %3506 = vmatpush1.bf16.msra.mxu0 %v2630
    %3507 = vmatprep.subr.bf16.mxu0 0
    %3508 = vmatpush1.bf16.msra.mxu0 %v2631
    %3509 = vmatprep.subr.bf16.mxu0 0
    %3510 = vmatpush1.bf16.msra.mxu0 %v2632
    %3511 = vmatprep.mubr.bf16.mxu0 %v847
    %3512 = vmatmul.mubr.bf16.gmra.mrb[0].mxu0 %v846
    %v3513 = vpop.f32.mrb[0].mxu0
    %v3514 = vadd.f32 %v3473, %v3513
    %v3515 = vpop.f32.mrb[0].mxu0
    %v3516 = vpop.f32.mrb[0].mxu0
    %v3517 = vadd.f32 %v3476, %v3516
    %v3518 = vpop.f32.mrb[0].mxu0
    %3519 = vdwg.mxu0
    %3520 = vmatprep.subr.bf16.mxu0 0
    %3521 = vmatpush1.bf16.msra.mxu0 %v2633
    %3522 = vmatprep.subr.bf16.mxu0 0
    %3523 = vmatpush1.bf16.msra.mxu0 %v2634
    %3524 = vmatprep.subr.bf16.mxu0 0
    %3525 = vmatpush1.bf16.msra.mxu0 %v2635
    %3526 = vmatprep.subr.bf16.mxu0 0
    %3527 = vmatpush1.bf16.msra.mxu0 %v2636
    %3528 = vmatprep.subr.bf16.mxu0 0
    %3529 = vmatpush1.bf16.msra.mxu0 %v2637
    %3530 = vmatprep.subr.bf16.mxu0 0
    %3531 = vmatpush1.bf16.msra.mxu0 %v2638
    %3532 = vmatprep.subr.bf16.mxu0 0
    %3533 = vmatpush1.bf16.msra.mxu0 %v2639
    %3534 = vmatprep.subr.bf16.mxu0 0
    %3535 = vmatpush1.bf16.msra.mxu0 %v2640
    %3536 = vmatprep.subr.bf16.mxu0 0
    %3537 = vmatpush1.bf16.msra.mxu0 %v2641
    %3538 = vmatprep.subr.bf16.mxu0 0
    %3539 = vmatpush1.bf16.msra.mxu0 %v2642
    %3540 = vmatprep.subr.bf16.mxu0 0
    %3541 = vmatpush1.bf16.msra.mxu0 %v2643
    %3542 = vmatprep.subr.bf16.mxu0 0
    %3543 = vmatpush1.bf16.msra.mxu0 %v2644
    %3544 = vmatprep.subr.bf16.mxu0 0
    %3545 = vmatpush1.bf16.msra.mxu0 %v2645
    %3546 = vmatprep.subr.bf16.mxu0 0
    %3547 = vmatpush1.bf16.msra.mxu0 %v2646
    %3548 = vmatprep.subr.bf16.mxu0 0
    %3549 = vmatpush1.bf16.msra.mxu0 %v2647
    %3550 = vmatprep.subr.bf16.mxu0 0
    %3551 = vmatpush1.bf16.msra.mxu0 %v2648
    %3552 = vmatprep.mubr.bf16.mxu0 %v849
    %3553 = vmatmul.mubr.bf16.gmra.mrb[0].mxu0 %v848
    %v3554 = vpop.f32.mrb[0].mxu0
    %v3555 = vadd.f32 %v3514, %v3554
    %v3556 = vpop.f32.mrb[0].mxu0
    %v3557 = vpop.f32.mrb[0].mxu0
    %v3558 = vadd.f32 %v3517, %v3557
    %v3559 = vpop.f32.mrb[0].mxu0
    %3560 = vdwg.mxu0
    %v3561 = vmax.f32 %v3555, 0.0
    %v3562 = vmax.f32 %v3558, 0.0
    %v3563 = vld [vmem:[%s3] sm:$0x1]
    %v3565 = vlaneseq
    %v3566 = vshrl.u32 %v3565, 7
    %v3567 = vsub.s32 0, %v3566
    %v3568 = vrot.slane %v3563, %v3567
    %v3570 = vmul.f32 %v3561, %v3568
    %v3571 = vmul.f32 %v3562, %v3568
    %3572 = vadd.xlane.f32.xlu0 %v3570
    %v3573 = vpop.xlane.xlu0 %3572
    %3574 = vadd.xlane.f32.xlu0 %v3571
    %v3575 = vpop.xlane.xlu0 %3574
    %s3576 = sld [smem:[#allocation2]]
    %v3577 = vstv %s3576
    %v3578 = vadd.f32 %v3573, %v3577
    %v3579 = vadd.f32 %v3575, %v3577
    %vm3580 = vcmask 7168
    %3581 = vst.msk [vmem:[#allocation7] sm:$0xff] %vm3580, %v3578
    %3582 = vst.msk [vmem:[#allocation7 + $0x8] sm:$0xff] %vm3580, %v3579
    // Predicated region
    $region30: #{tpu_custom_call.1} parent=1 // pred_check
      _
    $region31: #{tpu_custom_call.1} parent=1 // pred_check_branch
      %3584 = sbr.rel (0) target = $region33
    $region32: #{tpu_custom_call.1} parent=1 // pred_region
      // Predicated region
      $region34: #{tpu_custom_call.1} parent=32 // pred_check
        _
      $region35: #{tpu_custom_call.1} parent=32 // pred_check_branch
        %3586 = sbr.rel (0) target = $region37
      $region36: #{tpu_custom_call.1} parent=32 // pred_region
        // Predicated region
        $region38: #{tpu_custom_call.1} parent=36 // pred_check
          _
        $region39: #{tpu_custom_call.1} parent=36 // pred_check_branch
          %3588 = sbr.rel target = $region41
        $region40: #{tpu_custom_call.1} parent=36 // pred_region
          // Predicated region
          $region53: #{tpu_custom_call.1} parent=40 // pred_check
            _
          $region54: #{tpu_custom_call.1} parent=40 // pred_check_branch
            %3603 = sbr.rel (0) target = $region56
          $region55: #{tpu_custom_call.1} parent=40 // pred_region
            loop: start=0, step=1, limit=1
            $region57: #{tpu_custom_call.1} parent=55 // loop_pre_header
              _
            $region58: #{tpu_custom_call.1} parent=55 // loop_header
              %s3606 = sphi 0, %s3610
              %p3607 = scmp.ge.s32.totalorder %s3606, 1
              %s3611 = sphi [#allocation7], [#allocation7]
              %s3612 = sphi %s5, %s5
            $region59: #{tpu_custom_call.1} parent=55 // loop_header_branch
              %3609 = sbr.rel (%p3607) target = $region63
            $region60: #{tpu_custom_call.1} parent=55 // loop_body
              %v3613 = vld [vmem:[%s3611] sm:$0x3]
              %3614 = vst [vmem:[%s3612] sm:$0x3] %v3613
            $region61: #{tpu_custom_call.1} parent=55 // loop_footer
              %s3610 = sadd.s32 1, %s3606
            $region62: #{tpu_custom_call.1} parent=55 // loop_footer_branch
              %3605 = sbr.rel target = $region58
            $region63: #{tpu_custom_call.1} parent=55 // loop_exit
              _
          $region56: #{tpu_custom_call.1} parent=40 // pred_fallthru
            _
        $region41: #{tpu_custom_call.1} parent=36 // pred_fallthru
          _
        // Predicated region
        $region42: #{tpu_custom_call.1} parent=36 // pred_check
          _
        $region43: #{tpu_custom_call.1} parent=36 // pred_check_branch
          %3590 = sbr.rel (0) target = $region45
        $region44: #{tpu_custom_call.1} parent=36 // pred_region
          loop: start=0, step=1, limit=1
          $region46: #{tpu_custom_call.1} parent=44 // loop_pre_header
            _
          $region47: #{tpu_custom_call.1} parent=44 // loop_header
            %s3593 = sphi 0, %s3597
            %p3594 = scmp.ge.s32.totalorder %s3593, 1
            %s3598 = sphi [#allocation7], [#allocation7]
            %s3599 = sphi %s5, %s5
          $region48: #{tpu_custom_call.1} parent=44 // loop_header_branch
            %3596 = sbr.rel (%p3594) target = $region52
          $region49: #{tpu_custom_call.1} parent=44 // loop_body
            %v3600 = vld [vmem:[%s3598] sm:$0x3]
            %3601 = vst [vmem:[%s3599] sm:$0x3] %v3600
          $region50: #{tpu_custom_call.1} parent=44 // loop_footer
            %s3597 = sadd.s32 1, %s3593
          $region51: #{tpu_custom_call.1} parent=44 // loop_footer_branch
            %3592 = sbr.rel target = $region47
          $region52: #{tpu_custom_call.1} parent=44 // loop_exit
            _
        $region45: #{tpu_custom_call.1} parent=36 // pred_fallthru
          _
      $region37: #{tpu_custom_call.1} parent=32 // pred_fallthru
        _
      %3615 = vnop
    $region33: #{tpu_custom_call.1} parent=1 // pred_fallthru
      _
    // Predicated region
    $region64: #{tpu_custom_call.1} parent=1 // pred_check
      _
    $region65: #{tpu_custom_call.1} parent=1 // pred_check_branch
      %3617 = sbr.rel (0) target = $region67
    $region66: #{tpu_custom_call.1} parent=1 // pred_region
      _
    $region67: #{tpu_custom_call.1} parent=1 // pred_fallthru
      _
    %3618 = vsyncpa [#allocation4], 1
    %3619 = vsyncpa [#allocation6], 1

</llo_original>
